<compile_context>
chip_gen: v5e
topology: v5e:2x2
jax: 0.10.0
libtpu: 0.0.40
codegen_flags: <defaults>
</compile_context>

<pallas_src>
import functools

import jax
import jax.numpy as jnp
import numpy as np
from jax import lax
from jax.experimental import pallas as pl
from jax.experimental.pallas import tpu as pltpu

EPS = 1e-5


def _inverted_residual_kernel(x_ref, w_exp_ref, w_red_ref, pexp_ref, pout_ref,
                              mask_ref, out_ref, *, W):
    """Whole block in (C, P) layout, P = N*H*W on the lane axis, channels on sublanes."""
    N, Cin, HW = x_ref.shape
    P = N * HW
    Cexp = w_exp_ref.shape[0]
    inv_p = 1.0 / P

    # ---- assemble lane-dense (Cin, P) activations.  Lane index p = n*H*W + h*W + w,
    #      so each batch image is a contiguous (128-aligned) lane block: pure lane
    #      concat, no transpose needed (host-side transpose ops eliminated).
    x = jnp.concatenate([x_ref[n] for n in range(N)], axis=1)          # (Cin, P)

    # ---- expand: 1x1 conv == (Cexp, Cin) @ (Cin, P) MXU matmul.
    #      Conv bias omitted: constant per channel, exactly cancelled by BN1 batch stats.
    # TODO(synk): at production channel counts, cast matmul operands to bf16 (keep f32
    # accumulate) and tile contraction dims to 256-multiples (v6e/v7x) / 128 (v5e).
    y = jnp.dot(w_exp_ref[...], x, preferred_element_type=jnp.float32)  # (Cexp, P)

    # ---- packed per-Cexp params: [9 dw taps | b_dw | g1 | be1] ----
    pexp = pexp_ref[...]                                               # (Cexp, 12)
    w_dw = pexp[:, 0:9]                                                # tap = ky*3 + kx
    b_dw = pexp[:, 9:10]
    g1, be1 = pexp[:, 10:11], pexp[:, 11:12]

    # ---- BN1: single-pass batch stats, folded scale/shift, fused ReLU ----
    m1 = jnp.sum(y, axis=1, keepdims=True) * inv_p
    q1 = jnp.sum(y * y, axis=1, keepdims=True) * inv_p
    var1 = jnp.maximum(q1 - m1 * m1, 0.0)      # clamp: E[y^2]-mean^2 can go <0 in f32
    scale1 = g1 * lax.rsqrt(var1 + EPS)
    shift1 = be1 - m1 * scale1
    y = jnp.maximum(y * scale1 + shift1, 0.0)

    # ---- depthwise 3x3, padding=1, stride=1: 8 XLU lane rotations + precomputed
    #      boundary masks.  NOTE: this roll+mask scheme is correct ONLY for
    #      3x3 / pad=1 / stride=1 — the taps that would wrap across an image (or batch)
    #      boundary are exactly the masked ones; any other kernel size / stride /
    #      dilation would silently leak across images.
    masks = mask_ref[...]                                              # (9, P) f32 {0,1}
    acc = jnp.zeros((Cexp, P), jnp.float32)
    for tap in range(9):
        dy, dx = tap // 3 - 1, tap % 3 - 1
        shift = dy * W + dx
        w_tap = w_dw[:, tap:tap + 1]
        if shift == 0:
            acc = acc + y * w_tap                                      # center: mask==1
        else:
            src = pltpu.roll(y, shift=(-shift) % P, axis=1)
            acc = acc + (src * w_tap) * masks[tap:tap + 1, :]
    acc = acc + b_dw

    # ---- reduce: 1x1 conv == (Cout, Cexp) @ (Cexp, P) MXU matmul.
    #      Conv bias omitted: cancelled by BN2 batch stats.
    z = jnp.dot(w_red_ref[...], acc, preferred_element_type=jnp.float32)

    # ---- BN2 (single pass, folded scale/shift) + residual add (Cin == Cout) ----
    pout = pout_ref[...]                                               # (Cout, 2)
    g2, be2 = pout[:, 0:1], pout[:, 1:2]
    m2 = jnp.sum(z, axis=1, keepdims=True) * inv_p
    q2 = jnp.sum(z * z, axis=1, keepdims=True) * inv_p
    var2 = jnp.maximum(q2 - m2 * m2, 0.0)
    scale2 = g2 * lax.rsqrt(var2 + EPS)
    shift2 = be2 - m2 * scale2
    res = z * scale2 + shift2 + x                                      # (Cout, P)

    # ---- lane-dense writeback, one contiguous 128-aligned block per batch image ----
    for n in range(N):
        out_ref[n] = res[:, n * HW:(n + 1) * HW]


def make_dw_masks(N, H, W):
    """(9, N*H*W) f32 validity masks for the 3x3/pad=1 taps in flattened-lane layout."""
    P = N * H * W
    p = np.arange(P)
    w_idx = p % W
    h_idx = (p // W) % H
    masks = np.empty((9, P), np.float32)
    for tap in range(9):
        dy, dx = tap // 3 - 1, tap % 3 - 1
        masks[tap] = ((h_idx + dy >= 0) & (h_idx + dy < H) &
                      (w_idx + dx >= 0) & (w_idx + dx < W)).astype(np.float32)
    return jnp.asarray(masks)


def inverted_residual_block(x_nchw, params, masks):
    """x_nchw: (N, Cin, H, W) float32.  Returns (N, Cout, H, W)."""
    x = x_nchw.astype(jnp.float32)
    N, Cin, H, W = x.shape
    Cout = params["w_red"].shape[0]
    assert Cout == Cin, "residual add requires out_channels == in_channels"
    HW = H * W

    # Free contiguous reshape (no transpose / relayout / extra XLA kernel).
    x_flat = x.reshape(N, Cin, HW)

    kernel = functools.partial(_inverted_residual_kernel, W=W)
    vmem = pl.BlockSpec(memory_space=pltpu.MemorySpace.VMEM)
    # TODO(synk): for production-scale shapes, tile the lane (N*H*W) axis with a
    # "parallel" grid (lane tiles >= 512, multiples of 128), split each BN into a
    # stats-accumulate pass + apply pass, and budget VMEM per generation
    # (32 MiB scoped on v7x vs 128 MiB on v5e/v6e); not needed at these toy shapes
    # (whole problem is < 1 MiB of VMEM).
    out_flat = pl.pallas_call(
        kernel,
        out_shape=jax.ShapeDtypeStruct((N, Cout, HW), jnp.float32),
        in_specs=[vmem] * 6,
        out_specs=vmem,
    )(x_flat, params["w_exp"], params["w_red"], params["p_exp"], params["p_out"], masks)

    return out_flat.reshape(N, Cout, H, W)


def make_params(key, in_channels, out_channels, expansion_factor=6):
    Cin, Cout = in_channels, out_channels
    Cexp = Cin * expansion_factor
    ks = jax.random.split(key, 10)
    # PyTorch-layout weights (OIHW) used for the reference; kernel-layout derived below.
    w_exp_oihw = 0.1 * jax.random.normal(ks[0], (Cexp, Cin, 1, 1), jnp.float32)
    b_exp = 0.1 * jax.random.normal(ks[1], (Cexp,), jnp.float32)
    w_dw_oihw = 0.1 * jax.random.normal(ks[2], (Cexp, 1, 3, 3), jnp.float32)
    b_dw = 0.1 * jax.random.normal(ks[3], (Cexp,), jnp.float32)
    w_red_oihw = 0.1 * jax.random.normal(ks[4], (Cout, Cexp, 1, 1), jnp.float32)
    b_red = 0.1 * jax.random.normal(ks[5], (Cout,), jnp.float32)
    g1 = 1.0 + 0.1 * jax.random.normal(ks[6], (Cexp,), jnp.float32)
    be1 = 0.1 * jax.random.normal(ks[7], (Cexp,), jnp.float32)
    g2 = 1.0 + 0.1 * jax.random.normal(ks[8], (Cout,), jnp.float32)
    be2 = 0.1 * jax.random.normal(ks[9], (Cout,), jnp.float32)

    # Kernel-layout params.  b_exp / b_red are intentionally NOT passed to the kernel:
    # per-channel constants feeding a training-mode BatchNorm cancel exactly.
    p_exp = jnp.concatenate(
        [w_dw_oihw.reshape(Cexp, 9), b_dw.reshape(Cexp, 1),
         g1.reshape(Cexp, 1), be1.reshape(Cexp, 1)], axis=1)            # (Cexp, 12)
    p_out = jnp.concatenate(
        [g2.reshape(Cout, 1), be2.reshape(Cout, 1)], axis=1)            # (Cout, 2)

    kernel_params = {
        "w_exp": w_exp_oihw[:, :, 0, 0],                                # (Cexp, Cin)
        "w_red": w_red_oihw[:, :, 0, 0],                                # (Cout, Cexp)
        "p_exp": p_exp,
        "p_out": p_out,
    }
    torch_params = {
        "w_exp_oihw": w_exp_oihw, "b_exp": b_exp,
        "w_dw_oihw": w_dw_oihw, "b_dw": b_dw,
        "w_red_oihw": w_red_oihw, "b_red": b_red,
        "g1": g1, "be1": be1, "g2": g2, "be2": be2,
        "Cexp": Cexp,
    }
    return kernel_params, torch_params


def ref_forward(x, p):
    """Pure-JAX reference mirroring the PyTorch forward (NCHW), biases included."""
    dn = ("NCHW", "OIHW", "NCHW")
    hp = lax.Precision.HIGHEST

    def bn(t, g, b):
        m = jnp.mean(t, axis=(0, 2, 3), keepdims=True)
        v = jnp.mean((t - m) ** 2, axis=(0, 2, 3), keepdims=True)
        return (t - m) * lax.rsqrt(v + EPS) * g[None, :, None, None] + b[None, :, None, None]

    residual = x
    y = lax.conv_general_dilated(x, p["w_exp_oihw"], (1, 1), "VALID",
                                 dimension_numbers=dn, precision=hp)
    y = y + p["b_exp"][None, :, None, None]
    y = jnp.maximum(bn(y, p["g1"], p["be1"]), 0.0)
    y = lax.conv_general_dilated(y, p["w_dw_oihw"], (1, 1), ((1, 1), (1, 1)),
                                 dimension_numbers=dn,
                                 feature_group_count=p["Cexp"], precision=hp)
    y = y + p["b_dw"][None, :, None, None]
    z = lax.conv_general_dilated(y, p["w_red_oihw"], (1, 1), "VALID",
                                 dimension_numbers=dn, precision=hp)
    z = z + p["b_red"][None, :, None, None]
    z = bn(z, p["g2"], p["be2"])
    return z + residual


if __name__ == "__main__":
    key = jax.random.PRNGKey(0)
    kx, kp = jax.random.split(key)

    N, Cin, H, W = 2, 4, 16, 16          # residual add requires Cout == Cin
    Cout, expansion = Cin, 6

    x = jax.random.normal(kx, (N, Cin, H, W), jnp.float32)
    kernel_params, torch_params = make_params(kp, Cin, Cout, expansion)
    masks = make_dw_masks(N, H, W)

    out = jax.block_until_ready(inverted_residual_block(x, kernel_params, masks))
    ref = jax.block_until_ready(ref_forward(x, torch_params))

    assert out.shape == (N, Cout, H, W), out.shape
    np.testing.assert_allclose(np.asarray(out), np.asarray(ref), rtol=3e-2, atol=3e-2)
    print("KERNEL_OK")
</pallas_src>

<mosaic_0001>
module attributes {stable_mosaic.version = 11 : i64} {
  func.func @_inverted_residual_kernel(%arg0: memref<2x4x256xf32, #tpu.memory_space<vmem>>, %arg1: memref<24x4xf32, #tpu.memory_space<vmem>>, %arg2: memref<4x24xf32, #tpu.memory_space<vmem>>, %arg3: memref<24x12xf32, #tpu.memory_space<vmem>>, %arg4: memref<4x2xf32, #tpu.memory_space<vmem>>, %arg5: memref<9x512xf32, #tpu.memory_space<vmem>>, %arg6: memref<2x4x256xf32, #tpu.memory_space<vmem>>) attributes {dimension_semantics = [], scalar_prefetch = 0 : i64, scratch_operands = 0 : i64, tpu.core_type = #tpu.core_type<tc>} {
    %c0 = arith.constant 0 : index
    %c0_0 = arith.constant 0 : index
    %c0_1 = arith.constant 0 : index
    %0 = vector.load %arg0[%c0, %c0_0, %c0_1] : memref<2x4x256xf32, #tpu.memory_space<vmem>>, vector<1x4x256xf32>
    %1 = vector.shape_cast %0 : vector<1x4x256xf32> to vector<4x256xf32>
    %c1 = arith.constant 1 : index
    %c0_2 = arith.constant 0 : index
    %c0_3 = arith.constant 0 : index
    %2 = vector.load %arg0[%c1, %c0_2, %c0_3] : memref<2x4x256xf32, #tpu.memory_space<vmem>>, vector<1x4x256xf32>
    %3 = vector.shape_cast %2 : vector<1x4x256xf32> to vector<4x256xf32>
    %4 = tpu.concatenate %1, %3 in 1 : vector<4x256xf32>, vector<4x256xf32> -> vector<4x512xf32>
    %c0_4 = arith.constant 0 : index
    %c0_5 = arith.constant 0 : index
    %5 = vector.load %arg1[%c0_4, %c0_5] : memref<24x4xf32, #tpu.memory_space<vmem>>, vector<24x4xf32>
    %cst = arith.constant dense<0.000000e+00> : vector<24x512xf32>
    %6 = tpu.matmul %5, %4, %cst {dimension_numbers = #tpu.dot_dimension_numbers<[1], [0], [0], [1], [0, 0, 1, 1], [], []>} : vector<24x4xf32>, vector<4x512xf32>, vector<24x512xf32> -> vector<24x512xf32>
    %c0_6 = arith.constant 0 : index
    %c0_7 = arith.constant 0 : index
    %7 = vector.load %arg3[%c0_6, %c0_7] : memref<24x12xf32, #tpu.memory_space<vmem>>, vector<24x12xf32>
    %8 = vector.extract_strided_slice %7 {offsets = [0, 0], sizes = [24, 9], strides = [1, 1]} : vector<24x12xf32> to vector<24x9xf32>
    %9 = vector.extract_strided_slice %7 {offsets = [0, 9], sizes = [24, 1], strides = [1, 1]} : vector<24x12xf32> to vector<24x1xf32>
    %10 = vector.extract_strided_slice %7 {offsets = [0, 10], sizes = [24, 1], strides = [1, 1]} : vector<24x12xf32> to vector<24x1xf32>
    %11 = vector.extract_strided_slice %7 {offsets = [0, 11], sizes = [24, 1], strides = [1, 1]} : vector<24x12xf32> to vector<24x1xf32>
    %cst_8 = arith.constant dense<0.000000e+00> : vector<24xf32>
    %12 = vector.multi_reduction <add>, %6, %cst_8 [1] : vector<24x512xf32> to vector<24xf32>
    %13 = vector.shape_cast %12 : vector<24xf32> to vector<24x1xf32>
    %cst_9 = arith.constant 0.001953125 : f32
    %14 = vector.broadcast %cst_9 : f32 to vector<24x1xf32>
    %15 = arith.mulf %13, %14 : vector<24x1xf32>
    %16 = arith.mulf %6, %6 : vector<24x512xf32>
    %cst_10 = arith.constant dense<0.000000e+00> : vector<24xf32>
    %17 = vector.multi_reduction <add>, %16, %cst_10 [1] : vector<24x512xf32> to vector<24xf32>
    %18 = vector.shape_cast %17 : vector<24xf32> to vector<24x1xf32>
    %cst_11 = arith.constant 0.001953125 : f32
    %19 = vector.broadcast %cst_11 : f32 to vector<24x1xf32>
    %20 = arith.mulf %18, %19 : vector<24x1xf32>
    %21 = arith.mulf %15, %15 : vector<24x1xf32>
    %22 = arith.subf %20, %21 : vector<24x1xf32>
    %cst_12 = arith.constant 0.000000e+00 : f32
    %23 = vector.broadcast %cst_12 : f32 to vector<24x1xf32>
    %24 = arith.maximumf %22, %23 : vector<24x1xf32>
    %cst_13 = arith.constant 9.99999974E-6 : f32
    %25 = vector.broadcast %cst_13 : f32 to vector<24x1xf32>
    %26 = arith.addf %24, %25 : vector<24x1xf32>
    %27 = math.rsqrt %26 : vector<24x1xf32>
    %28 = arith.mulf %10, %27 : vector<24x1xf32>
    %29 = arith.mulf %15, %28 : vector<24x1xf32>
    %30 = arith.subf %11, %29 : vector<24x1xf32>
    %31 = vector.broadcast %28 : vector<24x1xf32> to vector<24x512xf32>
    %32 = arith.mulf %6, %31 : vector<24x512xf32>
    %33 = vector.broadcast %30 : vector<24x1xf32> to vector<24x512xf32>
    %34 = arith.addf %32, %33 : vector<24x512xf32>
    %cst_14 = arith.constant 0.000000e+00 : f32
    %35 = vector.broadcast %cst_14 : f32 to vector<24x512xf32>
    %36 = arith.maximumf %34, %35 : vector<24x512xf32>
    %c0_15 = arith.constant 0 : index
    %c0_16 = arith.constant 0 : index
    %37 = vector.load %arg5[%c0_15, %c0_16] : memref<9x512xf32, #tpu.memory_space<vmem>>, vector<9x512xf32>
    %cst_17 = arith.constant 0.000000e+00 : f32
    %38 = vector.broadcast %cst_17 : f32 to vector<24x512xf32>
    %39 = vector.extract_strided_slice %8 {offsets = [0, 0], sizes = [24, 1], strides = [1, 1]} : vector<24x9xf32> to vector<24x1xf32>
    %c17_i32 = arith.constant 17 : i32
    %40 = tpu.dynamic_rotate %36 by %c17_i32 dim 1 : vector<24x512xf32>, i32 -> vector<24x512xf32>
    %41 = vector.broadcast %39 : vector<24x1xf32> to vector<24x512xf32>
    %42 = arith.mulf %40, %41 : vector<24x512xf32>
    %43 = vector.extract_strided_slice %37 {offsets = [0, 0], sizes = [1, 512], strides = [1, 1]} : vector<9x512xf32> to vector<1x512xf32>
    %44 = vector.broadcast %43 : vector<1x512xf32> to vector<24x512xf32>
    %45 = arith.mulf %42, %44 : vector<24x512xf32>
    %46 = arith.addf %38, %45 : vector<24x512xf32>
    %47 = vector.extract_strided_slice %8 {offsets = [0, 1], sizes = [24, 1], strides = [1, 1]} : vector<24x9xf32> to vector<24x1xf32>
    %c16_i32 = arith.constant 16 : i32
    %48 = tpu.dynamic_rotate %36 by %c16_i32 dim 1 : vector<24x512xf32>, i32 -> vector<24x512xf32>
    %49 = vector.broadcast %47 : vector<24x1xf32> to vector<24x512xf32>
    %50 = arith.mulf %48, %49 : vector<24x512xf32>
    %51 = vector.extract_strided_slice %37 {offsets = [1, 0], sizes = [1, 512], strides = [1, 1]} : vector<9x512xf32> to vector<1x512xf32>
    %52 = vector.broadcast %51 : vector<1x512xf32> to vector<24x512xf32>
    %53 = arith.mulf %50, %52 : vector<24x512xf32>
    %54 = arith.addf %46, %53 : vector<24x512xf32>
    %55 = vector.extract_strided_slice %8 {offsets = [0, 2], sizes = [24, 1], strides = [1, 1]} : vector<24x9xf32> to vector<24x1xf32>
    %c15_i32 = arith.constant 15 : i32
    %56 = tpu.dynamic_rotate %36 by %c15_i32 dim 1 : vector<24x512xf32>, i32 -> vector<24x512xf32>
    %57 = vector.broadcast %55 : vector<24x1xf32> to vector<24x512xf32>
    %58 = arith.mulf %56, %57 : vector<24x512xf32>
    %59 = vector.extract_strided_slice %37 {offsets = [2, 0], sizes = [1, 512], strides = [1, 1]} : vector<9x512xf32> to vector<1x512xf32>
    %60 = vector.broadcast %59 : vector<1x512xf32> to vector<24x512xf32>
    %61 = arith.mulf %58, %60 : vector<24x512xf32>
    %62 = arith.addf %54, %61 : vector<24x512xf32>
    %63 = vector.extract_strided_slice %8 {offsets = [0, 3], sizes = [24, 1], strides = [1, 1]} : vector<24x9xf32> to vector<24x1xf32>
    %c1_i32 = arith.constant 1 : i32
    %64 = tpu.dynamic_rotate %36 by %c1_i32 dim 1 : vector<24x512xf32>, i32 -> vector<24x512xf32>
    %65 = vector.broadcast %63 : vector<24x1xf32> to vector<24x512xf32>
    %66 = arith.mulf %64, %65 : vector<24x512xf32>
    %67 = vector.extract_strided_slice %37 {offsets = [3, 0], sizes = [1, 512], strides = [1, 1]} : vector<9x512xf32> to vector<1x512xf32>
    %68 = vector.broadcast %67 : vector<1x512xf32> to vector<24x512xf32>
    %69 = arith.mulf %66, %68 : vector<24x512xf32>
    %70 = arith.addf %62, %69 : vector<24x512xf32>
    %71 = vector.extract_strided_slice %8 {offsets = [0, 4], sizes = [24, 1], strides = [1, 1]} : vector<24x9xf32> to vector<24x1xf32>
    %72 = vector.broadcast %71 : vector<24x1xf32> to vector<24x512xf32>
    %73 = arith.mulf %36, %72 : vector<24x512xf32>
    %74 = arith.addf %70, %73 : vector<24x512xf32>
    %75 = vector.extract_strided_slice %8 {offsets = [0, 5], sizes = [24, 1], strides = [1, 1]} : vector<24x9xf32> to vector<24x1xf32>
    %c511_i32 = arith.constant 511 : i32
    %76 = tpu.dynamic_rotate %36 by %c511_i32 dim 1 : vector<24x512xf32>, i32 -> vector<24x512xf32>
    %77 = vector.broadcast %75 : vector<24x1xf32> to vector<24x512xf32>
    %78 = arith.mulf %76, %77 : vector<24x512xf32>
    %79 = vector.extract_strided_slice %37 {offsets = [5, 0], sizes = [1, 512], strides = [1, 1]} : vector<9x512xf32> to vector<1x512xf32>
    %80 = vector.broadcast %79 : vector<1x512xf32> to vector<24x512xf32>
    %81 = arith.mulf %78, %80 : vector<24x512xf32>
    %82 = arith.addf %74, %81 : vector<24x512xf32>
    %83 = vector.extract_strided_slice %8 {offsets = [0, 6], sizes = [24, 1], strides = [1, 1]} : vector<24x9xf32> to vector<24x1xf32>
    %c497_i32 = arith.constant 497 : i32
    %84 = tpu.dynamic_rotate %36 by %c497_i32 dim 1 : vector<24x512xf32>, i32 -> vector<24x512xf32>
    %85 = vector.broadcast %83 : vector<24x1xf32> to vector<24x512xf32>
    %86 = arith.mulf %84, %85 : vector<24x512xf32>
    %87 = vector.extract_strided_slice %37 {offsets = [6, 0], sizes = [1, 512], strides = [1, 1]} : vector<9x512xf32> to vector<1x512xf32>
    %88 = vector.broadcast %87 : vector<1x512xf32> to vector<24x512xf32>
    %89 = arith.mulf %86, %88 : vector<24x512xf32>
    %90 = arith.addf %82, %89 : vector<24x512xf32>
    %91 = vector.extract_strided_slice %8 {offsets = [0, 7], sizes = [24, 1], strides = [1, 1]} : vector<24x9xf32> to vector<24x1xf32>
    %c496_i32 = arith.constant 496 : i32
    %92 = tpu.dynamic_rotate %36 by %c496_i32 dim 1 : vector<24x512xf32>, i32 -> vector<24x512xf32>
    %93 = vector.broadcast %91 : vector<24x1xf32> to vector<24x512xf32>
    %94 = arith.mulf %92, %93 : vector<24x512xf32>
    %95 = vector.extract_strided_slice %37 {offsets = [7, 0], sizes = [1, 512], strides = [1, 1]} : vector<9x512xf32> to vector<1x512xf32>
    %96 = vector.broadcast %95 : vector<1x512xf32> to vector<24x512xf32>
    %97 = arith.mulf %94, %96 : vector<24x512xf32>
    %98 = arith.addf %90, %97 : vector<24x512xf32>
    %99 = vector.extract_strided_slice %8 {offsets = [0, 8], sizes = [24, 1], strides = [1, 1]} : vector<24x9xf32> to vector<24x1xf32>
    %c495_i32 = arith.constant 495 : i32
    %100 = tpu.dynamic_rotate %36 by %c495_i32 dim 1 : vector<24x512xf32>, i32 -> vector<24x512xf32>
    %101 = vector.broadcast %99 : vector<24x1xf32> to vector<24x512xf32>
    %102 = arith.mulf %100, %101 : vector<24x512xf32>
    %103 = vector.extract_strided_slice %37 {offsets = [8, 0], sizes = [1, 512], strides = [1, 1]} : vector<9x512xf32> to vector<1x512xf32>
    %104 = vector.broadcast %103 : vector<1x512xf32> to vector<24x512xf32>
    %105 = arith.mulf %102, %104 : vector<24x512xf32>
    %106 = arith.addf %98, %105 : vector<24x512xf32>
    %107 = vector.broadcast %9 : vector<24x1xf32> to vector<24x512xf32>
    %108 = arith.addf %106, %107 : vector<24x512xf32>
    %c0_18 = arith.constant 0 : index
    %c0_19 = arith.constant 0 : index
    %109 = vector.load %arg2[%c0_18, %c0_19] : memref<4x24xf32, #tpu.memory_space<vmem>>, vector<4x24xf32>
    %cst_20 = arith.constant dense<0.000000e+00> : vector<4x512xf32>
    %110 = tpu.matmul %109, %108, %cst_20 {dimension_numbers = #tpu.dot_dimension_numbers<[1], [0], [0], [1], [0, 0, 1, 1], [], []>} : vector<4x24xf32>, vector<24x512xf32>, vector<4x512xf32> -> vector<4x512xf32>
    %c0_21 = arith.constant 0 : index
    %c0_22 = arith.constant 0 : index
    %111 = vector.load %arg4[%c0_21, %c0_22] : memref<4x2xf32, #tpu.memory_space<vmem>>, vector<4x2xf32>
    %112 = vector.extract_strided_slice %111 {offsets = [0, 0], sizes = [4, 1], strides = [1, 1]} : vector<4x2xf32> to vector<4x1xf32>
    %113 = vector.extract_strided_slice %111 {offsets = [0, 1], sizes = [4, 1], strides = [1, 1]} : vector<4x2xf32> to vector<4x1xf32>
    %cst_23 = arith.constant dense<0.000000e+00> : vector<4xf32>
    %114 = vector.multi_reduction <add>, %110, %cst_23 [1] : vector<4x512xf32> to vector<4xf32>
    %115 = vector.shape_cast %114 : vector<4xf32> to vector<4x1xf32>
    %cst_24 = arith.constant 0.001953125 : f32
    %116 = vector.broadcast %cst_24 : f32 to vector<4x1xf32>
    %117 = arith.mulf %115, %116 : vector<4x1xf32>
    %118 = arith.mulf %110, %110 : vector<4x512xf32>
    %cst_25 = arith.constant dense<0.000000e+00> : vector<4xf32>
    %119 = vector.multi_reduction <add>, %118, %cst_25 [1] : vector<4x512xf32> to vector<4xf32>
    %120 = vector.shape_cast %119 : vector<4xf32> to vector<4x1xf32>
    %cst_26 = arith.constant 0.001953125 : f32
    %121 = vector.broadcast %cst_26 : f32 to vector<4x1xf32>
    %122 = arith.mulf %120, %121 : vector<4x1xf32>
    %123 = arith.mulf %117, %117 : vector<4x1xf32>
    %124 = arith.subf %122, %123 : vector<4x1xf32>
    %cst_27 = arith.constant 0.000000e+00 : f32
    %125 = vector.broadcast %cst_27 : f32 to vector<4x1xf32>
    %126 = arith.maximumf %124, %125 : vector<4x1xf32>
    %cst_28 = arith.constant 9.99999974E-6 : f32
    %127 = vector.broadcast %cst_28 : f32 to vector<4x1xf32>
    %128 = arith.addf %126, %127 : vector<4x1xf32>
    %129 = math.rsqrt %128 : vector<4x1xf32>
    %130 = arith.mulf %112, %129 : vector<4x1xf32>
    %131 = arith.mulf %117, %130 : vector<4x1xf32>
    %132 = arith.subf %113, %131 : vector<4x1xf32>
    %133 = vector.broadcast %130 : vector<4x1xf32> to vector<4x512xf32>
    %134 = arith.mulf %110, %133 : vector<4x512xf32>
    %135 = vector.broadcast %132 : vector<4x1xf32> to vector<4x512xf32>
    %136 = arith.addf %134, %135 : vector<4x512xf32>
    %137 = arith.addf %136, %4 : vector<4x512xf32>
    %138 = vector.extract_strided_slice %137 {offsets = [0, 0], sizes = [4, 256], strides = [1, 1]} : vector<4x512xf32> to vector<4x256xf32>
    %c0_29 = arith.constant 0 : index
    %c0_30 = arith.constant 0 : index
    %c0_31 = arith.constant 0 : index
    %139 = vector.load %arg6[%c0_29, %c0_30, %c0_31] : memref<2x4x256xf32, #tpu.memory_space<vmem>>, vector<1x4x256xf32>
    %140 = vector.shape_cast %139 : vector<1x4x256xf32> to vector<4x256xf32>
    %141 = vector.shape_cast %138 : vector<4x256xf32> to vector<1x4x256xf32>
    tpu.vector_store %arg6[%c0_29, %c0_30, %c0_31], %141 {strides = array<i32>} : memref<2x4x256xf32, #tpu.memory_space<vmem>>, vector<1x4x256xf32>,
    %142 = vector.extract_strided_slice %137 {offsets = [0, 256], sizes = [4, 256], strides = [1, 1]} : vector<4x512xf32> to vector<4x256xf32>
    %c1_32 = arith.constant 1 : index
    %c0_33 = arith.constant 0 : index
    %c0_34 = arith.constant 0 : index
    %143 = vector.load %arg6[%c1_32, %c0_33, %c0_34] : memref<2x4x256xf32, #tpu.memory_space<vmem>>, vector<1x4x256xf32>
    %144 = vector.shape_cast %143 : vector<1x4x256xf32> to vector<4x256xf32>
    %145 = vector.shape_cast %142 : vector<4x256xf32> to vector<1x4x256xf32>
    tpu.vector_store %arg6[%c1_32, %c0_33, %c0_34], %145 {strides = array<i32>} : memref<2x4x256xf32, #tpu.memory_space<vmem>>, vector<1x4x256xf32>,
    return
  }
}

</mosaic_0001>

<llo_original>
// kernel: tpu_custom_call.1
$region0: #{tpu_custom_call.1}
  #allocation0 [shape = 'u32[]', space=smem, size = 0x4, offset = 0x4, fixed_abs, tag = 'smem constant byte address 0x4 - core index']
  #allocation1 [shape = 'u32[72,128]{1,0:T(1,128)}', space=vmem, size = 0x9000, scoped, tag = 'internal scratch']
  %s0 = inlined_call_operand.vmem [shape: f32[2,4,256], index: 0, kind: input, shape index: {}]
  %s1 = inlined_call_operand.vmem [shape: f32[24,4], index: 1, kind: input, shape index: {}]
  %s2 = inlined_call_operand.vmem [shape: f32[4,24], index: 2, kind: input, shape index: {}]
  %s3 = inlined_call_operand.vmem [shape: f32[24,12], index: 3, kind: input, shape index: {}]
  %s4 = inlined_call_operand.vmem [shape: f32[4,2], index: 4, kind: input, shape index: {}]
  %s5 = inlined_call_operand.hbm [shape: f32[9,512], index: 5, kind: input, shape index: {}]
  %s6 = inlined_call_operand.hbm [shape: f32[2,4,256], index: 6, kind: output, shape index: {}]
  %s7 = sld [smem:[#allocation0]]
  $region38: #{tpu_custom_call.1} parent=0
    _
  %s9 = ssub.s32 1, %s7
  %s10 = scalar_select 0, %s9, %s7
  $region1: #{tpu_custom_call.1} parent=0
    #allocation2 [shape = 'u8[32768]{0}', space=vmem, size = 0x8000, scoped, tag = 'input window, operand 5, single buffered']
    #allocation3 [shape = 's32[1]{0}', space=sflag, size = 0x4, scoped, tag = 'scoped memory for tpu_custom_call.1']
    #allocation4 [shape = 's32[1]{0}', space=sflag, size = 0x4, scoped, tag = 'scoped memory for tpu_custom_call.1']
    #allocation5 [shape = 'u8[8192]{0}', space=vmem, size = 0x2000, scoped, tag = 'output window, operand 0, single buffered']
    %11 = vsyncpa [#allocation3], 0
    %12 = vsyncpa [#allocation4], 0
    // Predicated region
    $region2: #{tpu_custom_call.1} parent=1 // pred_check
      _
    $region3: #{tpu_custom_call.1} parent=1 // pred_check_branch
      %14 = sbr.rel (0) target = $region5
    $region4: #{tpu_custom_call.1} parent=1 // pred_region
      _
    $region5: #{tpu_custom_call.1} parent=1 // pred_fallthru
      _
    // Predicated region
    $region6: #{tpu_custom_call.1} parent=1 // pred_check
      _
    $region7: #{tpu_custom_call.1} parent=1 // pred_check_branch
      %16 = sbr.rel (0) target = $region9
    $region8: #{tpu_custom_call.1} parent=1 // pred_region
      _
    $region9: #{tpu_custom_call.1} parent=1 // pred_fallthru
      _
    // Predicated region
    $region10: #{tpu_custom_call.1} parent=1 // pred_check
      _
    $region11: #{tpu_custom_call.1} parent=1 // pred_check_branch
      %18 = sbr.rel (0) target = $region13
    $region12: #{tpu_custom_call.1} parent=1 // pred_region
      _
    $region13: #{tpu_custom_call.1} parent=1 // pred_fallthru
      _
    // Predicated region
    $region14: #{tpu_custom_call.1} parent=1 // pred_check
      _
    $region15: #{tpu_custom_call.1} parent=1 // pred_check_branch
      %20 = sbr.rel (0) target = $region17
    $region16: #{tpu_custom_call.1} parent=1 // pred_region
      _
    $region17: #{tpu_custom_call.1} parent=1 // pred_fallthru
      _
    // Predicated region
    $region18: #{tpu_custom_call.1} parent=1 // pred_check
      _
    $region19: #{tpu_custom_call.1} parent=1 // pred_check_branch
      %22 = sbr.rel (0) target = $region21
    $region20: #{tpu_custom_call.1} parent=1 // pred_region
      _
    $region21: #{tpu_custom_call.1} parent=1 // pred_fallthru
      _
    // Predicated region
    $region22: #{tpu_custom_call.1} parent=1 // pred_check
      _
    $region23: #{tpu_custom_call.1} parent=1 // pred_check_branch
      %24 = sbr.rel (0) target = $region25
    $region24: #{tpu_custom_call.1} parent=1 // pred_region
      %26 = vsyncadd [#allocation3], 0
      %s27 = sshll.u32 %s5, 4
      %s28 = int_to_ptr.hbm [resolvable:$true] %s27
      %s29 = sshll.u32 [#allocation2], 4
      %s30 = int_to_ptr.vmem [resolvable:$true] %s29
      %35 = dma.hbm_to_vmem [thread:$0]  %s28, 1024, %s30, [#allocation3], 512, 512, 32
    $region25: #{tpu_custom_call.1} parent=1 // pred_fallthru
      _
    // Predicated region
    $region26: #{tpu_custom_call.1} parent=1 // pred_check
      _
    $region27: #{tpu_custom_call.1} parent=1 // pred_check_branch
      %37 = sbr.rel (0) target = $region29
    $region28: #{tpu_custom_call.1} parent=1 // pred_region
      %39 = dma.done [#allocation3], 1024
    $region29: #{tpu_custom_call.1} parent=1 // pred_fallthru
      _
    %v40 = vld [vmem:[%s0] sm:$0xff]
    %s41 = scalar_lea.vmem %s0, 8
    %v42 = vld [vmem:[%s41] sm:$0xff]
    %44 = vst [vmem:[#allocation1] ss:$2 sm:$0xff] %v40
    %v45 = vld.sshfl [vmem:[#allocation1] sm:$0xff pattern:$0x75316420]
    %v46 = vld.sshfl [vmem:[#allocation1 + $0x8] sm:$0xff pattern:$0x75316420]
    %50 = vst [vmem:[#allocation1] ss:$2 sm:$0xff] %v42
    %v51 = vld.sshfl [vmem:[#allocation1] sm:$0xff pattern:$0x75316420]
    %v52 = vld.sshfl [vmem:[#allocation1 + $0x8] sm:$0xff pattern:$0x75316420]
    %v55 = vld [vmem:[%s1] sm:$0xff]
    %v56 = vld [vmem:[%s1 + $0x8] sm:$0xff]
    %v57 = vld [vmem:[%s1 + $0x10] sm:$0xff]
    %vm58 = vcmask 31744
    %v60 = vsel %vm58, %v55, 0
    %v63 = vsel %vm58, %v56, 0
    %v66 = vsel %vm58, %v57, 0
    %vm68 = vcmask 1043456
    %v69 = vsel %vm68, %v45, 0
    %v71 = vsel %vm68, %v46, 0
    %v73 = vsel %vm68, %v51, 0
    %v75 = vsel %vm68, %v52, 0
    %77 = vmatpush.msra.mxu0 0.0
    %78 = vmatpush.msra.mxu0 0.0
    %79 = vmatpush.msra.mxu0 0.0
    %80 = vmatpush.msra.mxu0 0.0
    %81 = vmatpush.msra.mxu0 0.0
    %82 = vmatpush.msra.mxu0 0.0
    %83 = vmatpush.msra.mxu0 0.0
    %84 = vmatpush.msra.mxu0 0.0
    %85 = vmatpush.msra.mxu0 0.0
    %86 = vmatpush.msra.mxu0 0.0
    %87 = vmatpush.msra.mxu0 0.0
    %88 = vmatpush.msra.mxu0 0.0
    %89 = vmatpush.msra.mxu0 0.0
    %90 = vmatpush.msra.mxu0 0.0
    %91 = vmatpush.msra.mxu0 0.0
    %92 = vmatpush.msra.mxu0 %v69
    %93 = vmatmul.f32.gmra.mxu0 %v60
    %v94 = vpop.f32.mrf.mxu0
    %v95 = vadd.f32 0.0, %v94
    %96 = vmatmul.f32.gmra.mxu0 %v63
    %v97 = vpop.f32.mrf.mxu0
    %v98 = vadd.f32 0.0, %v97
    %99 = vmatmul.f32.gmra.mxu0 %v66
    %v100 = vpop.f32.mrf.mxu0
    %v101 = vadd.f32 0.0, %v100
    %102 = vdwg.mxu0
    %103 = vmatpush.msra.mxu0 0.0
    %104 = vmatpush.msra.mxu0 0.0
    %105 = vmatpush.msra.mxu0 0.0
    %106 = vmatpush.msra.mxu0 0.0
    %107 = vmatpush.msra.mxu0 0.0
    %108 = vmatpush.msra.mxu0 0.0
    %109 = vmatpush.msra.mxu0 0.0
    %110 = vmatpush.msra.mxu0 0.0
    %111 = vmatpush.msra.mxu0 0.0
    %112 = vmatpush.msra.mxu0 0.0
    %113 = vmatpush.msra.mxu0 0.0
    %114 = vmatpush.msra.mxu0 0.0
    %115 = vmatpush.msra.mxu0 0.0
    %116 = vmatpush.msra.mxu0 0.0
    %117 = vmatpush.msra.mxu0 0.0
    %118 = vmatpush.msra.mxu0 %v71
    %119 = vmatmul.f32.gmra.mxu0 %v60
    %v120 = vpop.f32.mrf.mxu0
    %v121 = vadd.f32 0.0, %v120
    %122 = vmatmul.f32.gmra.mxu0 %v63
    %v123 = vpop.f32.mrf.mxu0
    %v124 = vadd.f32 0.0, %v123
    %125 = vmatmul.f32.gmra.mxu0 %v66
    %v126 = vpop.f32.mrf.mxu0
    %v127 = vadd.f32 0.0, %v126
    %128 = vdwg.mxu0
    %129 = vmatpush.msra.mxu0 0.0
    %130 = vmatpush.msra.mxu0 0.0
    %131 = vmatpush.msra.mxu0 0.0
    %132 = vmatpush.msra.mxu0 0.0
    %133 = vmatpush.msra.mxu0 0.0
    %134 = vmatpush.msra.mxu0 0.0
    %135 = vmatpush.msra.mxu0 0.0
    %136 = vmatpush.msra.mxu0 0.0
    %137 = vmatpush.msra.mxu0 0.0
    %138 = vmatpush.msra.mxu0 0.0
    %139 = vmatpush.msra.mxu0 0.0
    %140 = vmatpush.msra.mxu0 0.0
    %141 = vmatpush.msra.mxu0 0.0
    %142 = vmatpush.msra.mxu0 0.0
    %143 = vmatpush.msra.mxu0 0.0
    %144 = vmatpush.msra.mxu0 %v73
    %145 = vmatmul.f32.gmra.mxu0 %v60
    %v146 = vpop.f32.mrf.mxu0
    %v147 = vadd.f32 0.0, %v146
    %148 = vmatmul.f32.gmra.mxu0 %v63
    %v149 = vpop.f32.mrf.mxu0
    %v150 = vadd.f32 0.0, %v149
    %151 = vmatmul.f32.gmra.mxu0 %v66
    %v152 = vpop.f32.mrf.mxu0
    %v153 = vadd.f32 0.0, %v152
    %154 = vdwg.mxu0
    %155 = vmatpush.msra.mxu0 0.0
    %156 = vmatpush.msra.mxu0 0.0
    %157 = vmatpush.msra.mxu0 0.0
    %158 = vmatpush.msra.mxu0 0.0
    %159 = vmatpush.msra.mxu0 0.0
    %160 = vmatpush.msra.mxu0 0.0
    %161 = vmatpush.msra.mxu0 0.0
    %162 = vmatpush.msra.mxu0 0.0
    %163 = vmatpush.msra.mxu0 0.0
    %164 = vmatpush.msra.mxu0 0.0
    %165 = vmatpush.msra.mxu0 0.0
    %166 = vmatpush.msra.mxu0 0.0
    %167 = vmatpush.msra.mxu0 0.0
    %168 = vmatpush.msra.mxu0 0.0
    %169 = vmatpush.msra.mxu0 0.0
    %170 = vmatpush.msra.mxu0 %v75
    %171 = vmatmul.f32.gmra.mxu0 %v60
    %v172 = vpop.f32.mrf.mxu0
    %v173 = vadd.f32 0.0, %v172
    %174 = vmatmul.f32.gmra.mxu0 %v63
    %v175 = vpop.f32.mrf.mxu0
    %v176 = vadd.f32 0.0, %v175
    %177 = vmatmul.f32.gmra.mxu0 %v66
    %v178 = vpop.f32.mrf.mxu0
    %v179 = vadd.f32 0.0, %v178
    %180 = vdwg.mxu0
    %v181 = vld [vmem:[%s3] sm:$0xff]
    %v182 = vld [vmem:[%s3 + $0x8] sm:$0xff]
    %v183 = vld [vmem:[%s3 + $0x10] sm:$0xff]
    %v184 = vadd.f32 %v95, %v121
    %v185 = vadd.f32 %v184, %v147
    %v186 = vadd.f32 %v185, %v173
    %187 = vadd.xlane.f32.xlu0 %v186
    %v188 = vpop.xlane.xlu0 %187
    %v189 = vadd.f32 %v98, %v124
    %v190 = vadd.f32 %v189, %v150
    %v191 = vadd.f32 %v190, %v176
    %192 = vadd.xlane.f32.xlu0 %v191
    %v193 = vpop.xlane.xlu0 %192
    %v194 = vadd.f32 %v101, %v127
    %v195 = vadd.f32 %v194, %v153
    %v196 = vadd.f32 %v195, %v179
    %197 = vadd.xlane.f32.xlu0 %v196
    %v198 = vpop.xlane.xlu0 %197
    %v199 = vmul.f32 %v188, 0.001953125
    %v200 = vmul.f32 %v193, 0.001953125
    %v201 = vmul.f32 %v198, 0.001953125
    %v202 = vmul.f32 %v95, %v95
    %v203 = vmul.f32 %v121, %v121
    %v204 = vmul.f32 %v147, %v147
    %v205 = vmul.f32 %v173, %v173
    %v206 = vmul.f32 %v98, %v98
    %v207 = vmul.f32 %v124, %v124
    %v208 = vmul.f32 %v150, %v150
    %v209 = vmul.f32 %v176, %v176
    %v210 = vmul.f32 %v101, %v101
    %v211 = vmul.f32 %v127, %v127
    %v212 = vmul.f32 %v153, %v153
    %v213 = vmul.f32 %v179, %v179
    %v214 = vadd.f32 %v202, %v203
    %v215 = vadd.f32 %v214, %v204
    %v216 = vadd.f32 %v215, %v205
    %217 = vadd.xlane.f32.xlu0 %v216
    %v218 = vpop.xlane.xlu0 %217
    %v219 = vadd.f32 %v206, %v207
    %v220 = vadd.f32 %v219, %v208
    %v221 = vadd.f32 %v220, %v209
    %222 = vadd.xlane.f32.xlu0 %v221
    %v223 = vpop.xlane.xlu0 %222
    %v224 = vadd.f32 %v210, %v211
    %v225 = vadd.f32 %v224, %v212
    %v226 = vadd.f32 %v225, %v213
    %227 = vadd.xlane.f32.xlu0 %v226
    %v228 = vpop.xlane.xlu0 %227
    %v229 = vmul.f32 %v218, 0.001953125
    %v230 = vmul.f32 %v223, 0.001953125
    %v231 = vmul.f32 %v228, 0.001953125
    %v232 = vmul.f32 %v199, %v199
    %v233 = vmul.f32 %v200, %v200
    %v234 = vmul.f32 %v201, %v201
    %v235 = vsub.f32 %v229, %v232
    %v236 = vsub.f32 %v230, %v233
    %v237 = vsub.f32 %v231, %v234
    %v238 = vmax.f32 %v235, 0.0
    %v239 = vmax.f32 %v236, 0.0
    %v240 = vmax.f32 %v237, 0.0
    %v241 = vadd.f32 %v238, 1e-05
    %v242 = vadd.f32 %v239, 1e-05
    %v243 = vadd.f32 %v240, 1e-05
    %v244 = vrsqrt.pop %v241
    %v245 = vmul.f32 %v244, %v241
    %v246 = vmul.f32 %v245, %v244
    %v247 = vmul.f32 0.5, %v246
    %v248 = vsub.f32 1.5, %v247
    %v249 = vmul.f32 %v244, %v248
    %vm250 = vweird.f32 %v241
    %vm251 = vweird.f32 %v244
    %vm252 = vmor %vm250, %vm251
    %v253 = vsel %vm252, %v244, %v249
    %v254 = vrsqrt.pop %v242
    %v255 = vmul.f32 %v254, %v242
    %v256 = vmul.f32 %v255, %v254
    %v257 = vmul.f32 0.5, %v256
    %v258 = vsub.f32 1.5, %v257
    %v259 = vmul.f32 %v254, %v258
    %vm260 = vweird.f32 %v242
    %vm261 = vweird.f32 %v254
    %vm262 = vmor %vm260, %vm261
    %v263 = vsel %vm262, %v254, %v259
    %v264 = vrsqrt.pop %v243
    %v265 = vmul.f32 %v264, %v243
    %v266 = vmul.f32 %v265, %v264
    %v267 = vmul.f32 0.5, %v266
    %v268 = vsub.f32 1.5, %v267
    %v269 = vmul.f32 %v264, %v268
    %vm270 = vweird.f32 %v243
    %vm271 = vweird.f32 %v264
    %vm272 = vmor %vm270, %vm271
    %v273 = vsel %vm272, %v264, %v269
    %v274 = vmul.f32 %v181, %v253
    %v275 = vmul.f32 %v182, %v263
    %v276 = vmul.f32 %v183, %v273
    %v277 = vmul.f32 %v199, %v274
    %v278 = vmul.f32 %v200, %v275
    %v279 = vmul.f32 %v201, %v276
    %283 = vrot.lane.b32.xlu0 %v277, 1
    %v284 = vpop.permute.xlu0 %283
    %285 = vrot.lane.b32.xlu0 %v278, 1
    %v286 = vpop.permute.xlu0 %285
    %287 = vrot.lane.b32.xlu0 %v279, 1
    %v288 = vpop.permute.xlu0 %287
    %v292 = vsub.f32 %v181, %v284
    %v293 = vsub.f32 %v182, %v286
    %v294 = vsub.f32 %v183, %v288
    %296 = vset.pattern.permute.xlu0 10
    %297 = vperm.xlu0 %296, %v274
    %v298 = vpop.permute.xlu0 %297
    %301 = vset.pattern.permute.xlu0 10
    %302 = vperm.xlu0 %301, %v275
    %v303 = vpop.permute.xlu0 %302
    %306 = vset.pattern.permute.xlu0 10
    %307 = vperm.xlu0 %306, %v276
    %v308 = vpop.permute.xlu0 %307
    %v310 = vmul.f32 %v95, %v298
    %v311 = vmul.f32 %v121, %v298
    %v312 = vmul.f32 %v147, %v298
    %v313 = vmul.f32 %v173, %v298
    %v314 = vmul.f32 %v98, %v303
    %v315 = vmul.f32 %v124, %v303
    %v316 = vmul.f32 %v150, %v303
    %v317 = vmul.f32 %v176, %v303
    %v318 = vmul.f32 %v101, %v308
    %v319 = vmul.f32 %v127, %v308
    %v320 = vmul.f32 %v153, %v308
    %v321 = vmul.f32 %v179, %v308
    %323 = vset.pattern.permute.xlu0 11
    %324 = vperm.xlu0 %323, %v292
    %v325 = vpop.permute.xlu0 %324
    %328 = vset.pattern.permute.xlu0 11
    %329 = vperm.xlu0 %328, %v293
    %v330 = vpop.permute.xlu0 %329
    %333 = vset.pattern.permute.xlu0 11
    %334 = vperm.xlu0 %333, %v294
    %v335 = vpop.permute.xlu0 %334
    %v337 = vadd.f32 %v310, %v325
    %v338 = vadd.f32 %v311, %v325
    %v339 = vadd.f32 %v312, %v325
    %v340 = vadd.f32 %v313, %v325
    %v341 = vadd.f32 %v314, %v330
    %v342 = vadd.f32 %v315, %v330
    %v343 = vadd.f32 %v316, %v330
    %v344 = vadd.f32 %v317, %v330
    %v345 = vadd.f32 %v318, %v335
    %v346 = vadd.f32 %v319, %v335
    %v347 = vadd.f32 %v320, %v335
    %v348 = vadd.f32 %v321, %v335
    %v349 = vmax.f32 %v337, 0.0
    %v350 = vmax.f32 %v338, 0.0
    %v351 = vmax.f32 %v339, 0.0
    %v352 = vmax.f32 %v340, 0.0
    %v353 = vmax.f32 %v341, 0.0
    %v354 = vmax.f32 %v342, 0.0
    %v355 = vmax.f32 %v343, 0.0
    %v356 = vmax.f32 %v344, 0.0
    %v357 = vmax.f32 %v345, 0.0
    %v358 = vmax.f32 %v346, 0.0
    %v359 = vmax.f32 %v347, 0.0
    %v360 = vmax.f32 %v348, 0.0
    %v361 = vld [vmem:[#allocation2] sm:$0xff]
    %v362 = vld [vmem:[#allocation2 + $0x8] sm:$0xff]
    %v363 = vld [vmem:[#allocation2 + $0x10] sm:$0xff]
    %v364 = vld [vmem:[#allocation2 + $0x18] sm:$0xff]
    %v365 = vld [vmem:[#allocation2 + $0x20] sm:$0x1]
    %v366 = vld [vmem:[#allocation2 + $0x28] sm:$0x1]
    %v367 = vld [vmem:[#allocation2 + $0x30] sm:$0x1]
    %v368 = vld [vmem:[#allocation2 + $0x38] sm:$0x1]
    %369 = vrot.lane.b32.xlu0 %v349, 17
    %v370 = vpop.permute.xlu0 %369
    %371 = vrot.lane.b32.xlu0 %v353, 17
    %v372 = vpop.permute.xlu0 %371
    %373 = vrot.lane.b32.xlu0 %v357, 17
    %v374 = vpop.permute.xlu0 %373
    %375 = vrot.lane.b32.xlu0 %v350, 17
    %v376 = vpop.permute.xlu0 %375
    %377 = vrot.lane.b32.xlu0 %v354, 17
    %v378 = vpop.permute.xlu0 %377
    %379 = vrot.lane.b32.xlu0 %v358, 17
    %v380 = vpop.permute.xlu0 %379
    %381 = vrot.lane.b32.xlu0 %v351, 17
    %v382 = vpop.permute.xlu0 %381
    %383 = vrot.lane.b32.xlu0 %v355, 17
    %v384 = vpop.permute.xlu0 %383
    %385 = vrot.lane.b32.xlu0 %v359, 17
    %v386 = vpop.permute.xlu0 %385
    %387 = vrot.lane.b32.xlu0 %v352, 17
    %v388 = vpop.permute.xlu0 %387
    %389 = vrot.lane.b32.xlu0 %v356, 17
    %v390 = vpop.permute.xlu0 %389
    %391 = vrot.lane.b32.xlu0 %v360, 17
    %v392 = vpop.permute.xlu0 %391
    %v393 = vlaneseq
    %v394 = vand.u32 %v393, 127
    %vm395 = vcmp.lt.s32.totalorder %v394, 17
    %v396 = vsel %vm395, %v382, %v388
    %v397 = vsel %vm395, %v384, %v390
    %v398 = vsel %vm395, %v386, %v392
    %v399 = vsel %vm395, %v376, %v382
    %v400 = vsel %vm395, %v378, %v384
    %v401 = vsel %vm395, %v380, %v386
    %v402 = vsel %vm395, %v370, %v376
    %v403 = vsel %vm395, %v372, %v378
    %v404 = vsel %vm395, %v374, %v380
    %v405 = vsel %vm395, %v388, %v370
    %v406 = vsel %vm395, %v390, %v372
    %v407 = vsel %vm395, %v392, %v374
    %409 = vset.pattern.permute.xlu0 0
    %410 = vperm.xlu0 %409, %v181
    %v411 = vpop.permute.xlu0 %410
    %414 = vset.pattern.permute.xlu0 0
    %415 = vperm.xlu0 %414, %v182
    %v416 = vpop.permute.xlu0 %415
    %419 = vset.pattern.permute.xlu0 0
    %420 = vperm.xlu0 %419, %v183
    %v421 = vpop.permute.xlu0 %420
    %v423 = vmul.f32 %v405, %v411
    %v424 = vmul.f32 %v402, %v411
    %v425 = vmul.f32 %v399, %v411
    %v426 = vmul.f32 %v396, %v411
    %v427 = vmul.f32 %v406, %v416
    %v428 = vmul.f32 %v403, %v416
    %v429 = vmul.f32 %v400, %v416
    %v430 = vmul.f32 %v397, %v416
    %v431 = vmul.f32 %v407, %v421
    %v432 = vmul.f32 %v404, %v421
    %v433 = vmul.f32 %v401, %v421
    %v434 = vmul.f32 %v398, %v421
    %v435 = vperm.slane %v361, 0
    %v436 = vperm.slane %v362, 0
    %v437 = vperm.slane %v363, 0
    %v438 = vperm.slane %v364, 0
    %v439 = vmul.f32 %v423, %v435
    %v440 = vmul.f32 %v424, %v436
    %v441 = vmul.f32 %v425, %v437
    %v442 = vmul.f32 %v426, %v438
    %v443 = vmul.f32 %v427, %v435
    %v444 = vmul.f32 %v428, %v436
    %v445 = vmul.f32 %v429, %v437
    %v446 = vmul.f32 %v430, %v438
    %v447 = vmul.f32 %v431, %v435
    %v448 = vmul.f32 %v432, %v436
    %v449 = vmul.f32 %v433, %v437
    %v450 = vmul.f32 %v434, %v438
    %v451 = vadd.f32 %v439, 0.0
    %v452 = vadd.f32 %v440, 0.0
    %v453 = vadd.f32 %v441, 0.0
    %v454 = vadd.f32 %v442, 0.0
    %v455 = vadd.f32 %v443, 0.0
    %v456 = vadd.f32 %v444, 0.0
    %v457 = vadd.f32 %v445, 0.0
    %v458 = vadd.f32 %v446, 0.0
    %v459 = vadd.f32 %v447, 0.0
    %v460 = vadd.f32 %v448, 0.0
    %v461 = vadd.f32 %v449, 0.0
    %v462 = vadd.f32 %v450, 0.0
    %463 = vrot.lane.b32.xlu0 %v349, 16
    %v464 = vpop.permute.xlu0 %463
    %465 = vrot.lane.b32.xlu0 %v353, 16
    %v466 = vpop.permute.xlu0 %465
    %467 = vrot.lane.b32.xlu0 %v357, 16
    %v468 = vpop.permute.xlu0 %467
    %469 = vrot.lane.b32.xlu0 %v350, 16
    %v470 = vpop.permute.xlu0 %469
    %471 = vrot.lane.b32.xlu0 %v354, 16
    %v472 = vpop.permute.xlu0 %471
    %473 = vrot.lane.b32.xlu0 %v358, 16
    %v474 = vpop.permute.xlu0 %473
    %475 = vrot.lane.b32.xlu0 %v351, 16
    %v476 = vpop.permute.xlu0 %475
    %477 = vrot.lane.b32.xlu0 %v355, 16
    %v478 = vpop.permute.xlu0 %477
    %479 = vrot.lane.b32.xlu0 %v359, 16
    %v480 = vpop.permute.xlu0 %479
    %481 = vrot.lane.b32.xlu0 %v352, 16
    %v482 = vpop.permute.xlu0 %481
    %483 = vrot.lane.b32.xlu0 %v356, 16
    %v484 = vpop.permute.xlu0 %483
    %485 = vrot.lane.b32.xlu0 %v360, 16
    %v486 = vpop.permute.xlu0 %485
    %vm487 = vcmp.lt.s32.totalorder %v394, 16
    %v488 = vsel %vm487, %v476, %v482
    %v489 = vsel %vm487, %v478, %v484
    %v490 = vsel %vm487, %v480, %v486
    %v491 = vsel %vm487, %v470, %v476
    %v492 = vsel %vm487, %v472, %v478
    %v493 = vsel %vm487, %v474, %v480
    %v494 = vsel %vm487, %v464, %v470
    %v495 = vsel %vm487, %v466, %v472
    %v496 = vsel %vm487, %v468, %v474
    %v497 = vsel %vm487, %v482, %v464
    %v498 = vsel %vm487, %v484, %v466
    %v499 = vsel %vm487, %v486, %v468
    %500 = vset.pattern.permute.xlu0 1
    %501 = vperm.xlu0 %500, %v181
    %v502 = vpop.permute.xlu0 %501
    %504 = vset.pattern.permute.xlu0 1
    %505 = vperm.xlu0 %504, %v182
    %v506 = vpop.permute.xlu0 %505
    %508 = vset.pattern.permute.xlu0 1
    %509 = vperm.xlu0 %508, %v183
    %v510 = vpop.permute.xlu0 %509
    %v512 = vmul.f32 %v497, %v502
    %v513 = vmul.f32 %v494, %v502
    %v514 = vmul.f32 %v491, %v502
    %v515 = vmul.f32 %v488, %v502
    %v516 = vmul.f32 %v498, %v506
    %v517 = vmul.f32 %v495, %v506
    %v518 = vmul.f32 %v492, %v506
    %v519 = vmul.f32 %v489, %v506
    %v520 = vmul.f32 %v499, %v510
    %v521 = vmul.f32 %v496, %v510
    %v522 = vmul.f32 %v493, %v510
    %v523 = vmul.f32 %v490, %v510
    %v524 = vperm.slane %v361, 1
    %v525 = vperm.slane %v362, 1
    %v526 = vperm.slane %v363, 1
    %v527 = vperm.slane %v364, 1
    %v528 = vmul.f32 %v512, %v524
    %v529 = vmul.f32 %v513, %v525
    %v530 = vmul.f32 %v514, %v526
    %v531 = vmul.f32 %v515, %v527
    %v532 = vmul.f32 %v516, %v524
    %v533 = vmul.f32 %v517, %v525
    %v534 = vmul.f32 %v518, %v526
    %v535 = vmul.f32 %v519, %v527
    %v536 = vmul.f32 %v520, %v524
    %v537 = vmul.f32 %v521, %v525
    %v538 = vmul.f32 %v522, %v526
    %v539 = vmul.f32 %v523, %v527
    %v540 = vadd.f32 %v451, %v528
    %v541 = vadd.f32 %v452, %v529
    %v542 = vadd.f32 %v453, %v530
    %v543 = vadd.f32 %v454, %v531
    %v544 = vadd.f32 %v455, %v532
    %v545 = vadd.f32 %v456, %v533
    %v546 = vadd.f32 %v457, %v534
    %v547 = vadd.f32 %v458, %v535
    %v548 = vadd.f32 %v459, %v536
    %v549 = vadd.f32 %v460, %v537
    %v550 = vadd.f32 %v461, %v538
    %v551 = vadd.f32 %v462, %v539
    %552 = vrot.lane.b32.xlu0 %v349, 15
    %v553 = vpop.permute.xlu0 %552
    %554 = vrot.lane.b32.xlu0 %v353, 15
    %v555 = vpop.permute.xlu0 %554
    %556 = vrot.lane.b32.xlu0 %v357, 15
    %v557 = vpop.permute.xlu0 %556
    %558 = vrot.lane.b32.xlu0 %v350, 15
    %v559 = vpop.permute.xlu0 %558
    %560 = vrot.lane.b32.xlu0 %v354, 15
    %v561 = vpop.permute.xlu0 %560
    %562 = vrot.lane.b32.xlu0 %v358, 15
    %v563 = vpop.permute.xlu0 %562
    %564 = vrot.lane.b32.xlu0 %v351, 15
    %v565 = vpop.permute.xlu0 %564
    %566 = vrot.lane.b32.xlu0 %v355, 15
    %v567 = vpop.permute.xlu0 %566
    %568 = vrot.lane.b32.xlu0 %v359, 15
    %v569 = vpop.permute.xlu0 %568
    %570 = vrot.lane.b32.xlu0 %v352, 15
    %v571 = vpop.permute.xlu0 %570
    %572 = vrot.lane.b32.xlu0 %v356, 15
    %v573 = vpop.permute.xlu0 %572
    %574 = vrot.lane.b32.xlu0 %v360, 15
    %v575 = vpop.permute.xlu0 %574
    %vm576 = vcmp.lt.s32.totalorder %v394, 15
    %v577 = vsel %vm576, %v565, %v571
    %v578 = vsel %vm576, %v567, %v573
    %v579 = vsel %vm576, %v569, %v575
    %v580 = vsel %vm576, %v559, %v565
    %v581 = vsel %vm576, %v561, %v567
    %v582 = vsel %vm576, %v563, %v569
    %v583 = vsel %vm576, %v553, %v559
    %v584 = vsel %vm576, %v555, %v561
    %v585 = vsel %vm576, %v557, %v563
    %v586 = vsel %vm576, %v571, %v553
    %v587 = vsel %vm576, %v573, %v555
    %v588 = vsel %vm576, %v575, %v557
    %589 = vset.pattern.permute.xlu0 2
    %590 = vperm.xlu0 %589, %v181
    %v591 = vpop.permute.xlu0 %590
    %593 = vset.pattern.permute.xlu0 2
    %594 = vperm.xlu0 %593, %v182
    %v595 = vpop.permute.xlu0 %594
    %597 = vset.pattern.permute.xlu0 2
    %598 = vperm.xlu0 %597, %v183
    %v599 = vpop.permute.xlu0 %598
    %v601 = vmul.f32 %v586, %v591
    %v602 = vmul.f32 %v583, %v591
    %v603 = vmul.f32 %v580, %v591
    %v604 = vmul.f32 %v577, %v591
    %v605 = vmul.f32 %v587, %v595
    %v606 = vmul.f32 %v584, %v595
    %v607 = vmul.f32 %v581, %v595
    %v608 = vmul.f32 %v578, %v595
    %v609 = vmul.f32 %v588, %v599
    %v610 = vmul.f32 %v585, %v599
    %v611 = vmul.f32 %v582, %v599
    %v612 = vmul.f32 %v579, %v599
    %v613 = vperm.slane %v361, 2
    %v614 = vperm.slane %v362, 2
    %v615 = vperm.slane %v363, 2
    %v616 = vperm.slane %v364, 2
    %v617 = vmul.f32 %v601, %v613
    %v618 = vmul.f32 %v602, %v614
    %v619 = vmul.f32 %v603, %v615
    %v620 = vmul.f32 %v604, %v616
    %v621 = vmul.f32 %v605, %v613
    %v622 = vmul.f32 %v606, %v614
    %v623 = vmul.f32 %v607, %v615
    %v624 = vmul.f32 %v608, %v616
    %v625 = vmul.f32 %v609, %v613
    %v626 = vmul.f32 %v610, %v614
    %v627 = vmul.f32 %v611, %v615
    %v628 = vmul.f32 %v612, %v616
    %v629 = vadd.f32 %v540, %v617
    %v630 = vadd.f32 %v541, %v618
    %v631 = vadd.f32 %v542, %v619
    %v632 = vadd.f32 %v543, %v620
    %v633 = vadd.f32 %v544, %v621
    %v634 = vadd.f32 %v545, %v622
    %v635 = vadd.f32 %v546, %v623
    %v636 = vadd.f32 %v547, %v624
    %v637 = vadd.f32 %v548, %v625
    %v638 = vadd.f32 %v549, %v626
    %v639 = vadd.f32 %v550, %v627
    %v640 = vadd.f32 %v551, %v628
    %641 = vrot.lane.b32.xlu0 %v349, 1
    %v642 = vpop.permute.xlu0 %641
    %643 = vrot.lane.b32.xlu0 %v353, 1
    %v644 = vpop.permute.xlu0 %643
    %645 = vrot.lane.b32.xlu0 %v357, 1
    %v646 = vpop.permute.xlu0 %645
    %647 = vrot.lane.b32.xlu0 %v350, 1
    %v648 = vpop.permute.xlu0 %647
    %649 = vrot.lane.b32.xlu0 %v354, 1
    %v650 = vpop.permute.xlu0 %649
    %651 = vrot.lane.b32.xlu0 %v358, 1
    %v652 = vpop.permute.xlu0 %651
    %653 = vrot.lane.b32.xlu0 %v351, 1
    %v654 = vpop.permute.xlu0 %653
    %655 = vrot.lane.b32.xlu0 %v355, 1
    %v656 = vpop.permute.xlu0 %655
    %657 = vrot.lane.b32.xlu0 %v359, 1
    %v658 = vpop.permute.xlu0 %657
    %659 = vrot.lane.b32.xlu0 %v352, 1
    %v660 = vpop.permute.xlu0 %659
    %661 = vrot.lane.b32.xlu0 %v356, 1
    %v662 = vpop.permute.xlu0 %661
    %663 = vrot.lane.b32.xlu0 %v360, 1
    %v664 = vpop.permute.xlu0 %663
    %vm665 = vcmp.lt.s32.totalorder %v394, 1
    %v666 = vsel %vm665, %v654, %v660
    %v667 = vsel %vm665, %v656, %v662
    %v668 = vsel %vm665, %v658, %v664
    %v669 = vsel %vm665, %v648, %v654
    %v670 = vsel %vm665, %v650, %v656
    %v671 = vsel %vm665, %v652, %v658
    %v672 = vsel %vm665, %v642, %v648
    %v673 = vsel %vm665, %v644, %v650
    %v674 = vsel %vm665, %v646, %v652
    %v675 = vsel %vm665, %v660, %v642
    %v676 = vsel %vm665, %v662, %v644
    %v677 = vsel %vm665, %v664, %v646
    %678 = vset.pattern.permute.xlu0 3
    %679 = vperm.xlu0 %678, %v181
    %v680 = vpop.permute.xlu0 %679
    %682 = vset.pattern.permute.xlu0 3
    %683 = vperm.xlu0 %682, %v182
    %v684 = vpop.permute.xlu0 %683
    %686 = vset.pattern.permute.xlu0 3
    %687 = vperm.xlu0 %686, %v183
    %v688 = vpop.permute.xlu0 %687
    %v690 = vmul.f32 %v675, %v680
    %v691 = vmul.f32 %v672, %v680
    %v692 = vmul.f32 %v669, %v680
    %v693 = vmul.f32 %v666, %v680
    %v694 = vmul.f32 %v676, %v684
    %v695 = vmul.f32 %v673, %v684
    %v696 = vmul.f32 %v670, %v684
    %v697 = vmul.f32 %v667, %v684
    %v698 = vmul.f32 %v677, %v688
    %v699 = vmul.f32 %v674, %v688
    %v700 = vmul.f32 %v671, %v688
    %v701 = vmul.f32 %v668, %v688
    %v702 = vperm.slane %v361, 3
    %v703 = vperm.slane %v362, 3
    %v704 = vperm.slane %v363, 3
    %v705 = vperm.slane %v364, 3
    %v706 = vmul.f32 %v690, %v702
    %v707 = vmul.f32 %v691, %v703
    %v708 = vmul.f32 %v692, %v704
    %v709 = vmul.f32 %v693, %v705
    %v710 = vmul.f32 %v694, %v702
    %v711 = vmul.f32 %v695, %v703
    %v712 = vmul.f32 %v696, %v704
    %v713 = vmul.f32 %v697, %v705
    %v714 = vmul.f32 %v698, %v702
    %v715 = vmul.f32 %v699, %v703
    %v716 = vmul.f32 %v700, %v704
    %v717 = vmul.f32 %v701, %v705
    %v718 = vadd.f32 %v629, %v706
    %v719 = vadd.f32 %v630, %v707
    %v720 = vadd.f32 %v631, %v708
    %v721 = vadd.f32 %v632, %v709
    %v722 = vadd.f32 %v633, %v710
    %v723 = vadd.f32 %v634, %v711
    %v724 = vadd.f32 %v635, %v712
    %v725 = vadd.f32 %v636, %v713
    %v726 = vadd.f32 %v637, %v714
    %v727 = vadd.f32 %v638, %v715
    %v728 = vadd.f32 %v639, %v716
    %v729 = vadd.f32 %v640, %v717
    %730 = vset.pattern.permute.xlu0 4
    %731 = vperm.xlu0 %730, %v181
    %v732 = vpop.permute.xlu0 %731
    %734 = vset.pattern.permute.xlu0 4
    %735 = vperm.xlu0 %734, %v182
    %v736 = vpop.permute.xlu0 %735
    %738 = vset.pattern.permute.xlu0 4
    %739 = vperm.xlu0 %738, %v183
    %v740 = vpop.permute.xlu0 %739
    %v742 = vmul.f32 %v349, %v732
    %v743 = vmul.f32 %v350, %v732
    %v744 = vmul.f32 %v351, %v732
    %v745 = vmul.f32 %v352, %v732
    %v746 = vmul.f32 %v353, %v736
    %v747 = vmul.f32 %v354, %v736
    %v748 = vmul.f32 %v355, %v736
    %v749 = vmul.f32 %v356, %v736
    %v750 = vmul.f32 %v357, %v740
    %v751 = vmul.f32 %v358, %v740
    %v752 = vmul.f32 %v359, %v740
    %v753 = vmul.f32 %v360, %v740
    %v754 = vadd.f32 %v718, %v742
    %v755 = vadd.f32 %v719, %v743
    %v756 = vadd.f32 %v720, %v744
    %v757 = vadd.f32 %v721, %v745
    %v758 = vadd.f32 %v722, %v746
    %v759 = vadd.f32 %v723, %v747
    %v760 = vadd.f32 %v724, %v748
    %v761 = vadd.f32 %v725, %v749
    %v762 = vadd.f32 %v726, %v750
    %v763 = vadd.f32 %v727, %v751
    %v764 = vadd.f32 %v728, %v752
    %v765 = vadd.f32 %v729, %v753
    %766 = vrot.lane.b32.xlu0 %v349, 127
    %v767 = vpop.permute.xlu0 %766
    %768 = vrot.lane.b32.xlu0 %v353, 127
    %v769 = vpop.permute.xlu0 %768
    %770 = vrot.lane.b32.xlu0 %v357, 127
    %v771 = vpop.permute.xlu0 %770
    %772 = vrot.lane.b32.xlu0 %v350, 127
    %v773 = vpop.permute.xlu0 %772
    %774 = vrot.lane.b32.xlu0 %v354, 127
    %v775 = vpop.permute.xlu0 %774
    %776 = vrot.lane.b32.xlu0 %v358, 127
    %v777 = vpop.permute.xlu0 %776
    %778 = vrot.lane.b32.xlu0 %v351, 127
    %v779 = vpop.permute.xlu0 %778
    %780 = vrot.lane.b32.xlu0 %v355, 127
    %v781 = vpop.permute.xlu0 %780
    %782 = vrot.lane.b32.xlu0 %v359, 127
    %v783 = vpop.permute.xlu0 %782
    %784 = vrot.lane.b32.xlu0 %v352, 127
    %v785 = vpop.permute.xlu0 %784
    %786 = vrot.lane.b32.xlu0 %v356, 127
    %v787 = vpop.permute.xlu0 %786
    %788 = vrot.lane.b32.xlu0 %v360, 127
    %v789 = vpop.permute.xlu0 %788
    %vm790 = vcmp.lt.s32.totalorder %v394, 127
    %v791 = vsel %vm790, %v779, %v785
    %v792 = vsel %vm790, %v781, %v787
    %v793 = vsel %vm790, %v783, %v789
    %v794 = vsel %vm790, %v773, %v779
    %v795 = vsel %vm790, %v775, %v781
    %v796 = vsel %vm790, %v777, %v783
    %v797 = vsel %vm790, %v767, %v773
    %v798 = vsel %vm790, %v769, %v775
    %v799 = vsel %vm790, %v771, %v777
    %v800 = vsel %vm790, %v785, %v767
    %v801 = vsel %vm790, %v787, %v769
    %v802 = vsel %vm790, %v789, %v771
    %803 = vset.pattern.permute.xlu0 5
    %804 = vperm.xlu0 %803, %v181
    %v805 = vpop.permute.xlu0 %804
    %807 = vset.pattern.permute.xlu0 5
    %808 = vperm.xlu0 %807, %v182
    %v809 = vpop.permute.xlu0 %808
    %811 = vset.pattern.permute.xlu0 5
    %812 = vperm.xlu0 %811, %v183
    %v813 = vpop.permute.xlu0 %812
    %v815 = vmul.f32 %v797, %v805
    %v816 = vmul.f32 %v794, %v805
    %v817 = vmul.f32 %v791, %v805
    %v818 = vmul.f32 %v800, %v805
    %v819 = vmul.f32 %v798, %v809
    %v820 = vmul.f32 %v795, %v809
    %v821 = vmul.f32 %v792, %v809
    %v822 = vmul.f32 %v801, %v809
    %v823 = vmul.f32 %v799, %v813
    %v824 = vmul.f32 %v796, %v813
    %v825 = vmul.f32 %v793, %v813
    %v826 = vmul.f32 %v802, %v813
    %v827 = vperm.slane %v361, 5
    %v828 = vperm.slane %v362, 5
    %v829 = vperm.slane %v363, 5
    %v830 = vperm.slane %v364, 5
    %v831 = vmul.f32 %v815, %v827
    %v832 = vmul.f32 %v816, %v828
    %v833 = vmul.f32 %v817, %v829
    %v834 = vmul.f32 %v818, %v830
    %v835 = vmul.f32 %v819, %v827
    %v836 = vmul.f32 %v820, %v828
    %v837 = vmul.f32 %v821, %v829
    %v838 = vmul.f32 %v822, %v830
    %v839 = vmul.f32 %v823, %v827
    %v840 = vmul.f32 %v824, %v828
    %v841 = vmul.f32 %v825, %v829
    %v842 = vmul.f32 %v826, %v830
    %v843 = vadd.f32 %v754, %v831
    %v844 = vadd.f32 %v755, %v832
    %v845 = vadd.f32 %v756, %v833
    %v846 = vadd.f32 %v757, %v834
    %v847 = vadd.f32 %v758, %v835
    %v848 = vadd.f32 %v759, %v836
    %v849 = vadd.f32 %v760, %v837
    %v850 = vadd.f32 %v761, %v838
    %v851 = vadd.f32 %v762, %v839
    %v852 = vadd.f32 %v763, %v840
    %v853 = vadd.f32 %v764, %v841
    %v854 = vadd.f32 %v765, %v842
    %855 = vrot.lane.b32.xlu0 %v349, 113
    %v856 = vpop.permute.xlu0 %855
    %857 = vrot.lane.b32.xlu0 %v353, 113
    %v858 = vpop.permute.xlu0 %857
    %859 = vrot.lane.b32.xlu0 %v357, 113
    %v860 = vpop.permute.xlu0 %859
    %861 = vrot.lane.b32.xlu0 %v350, 113
    %v862 = vpop.permute.xlu0 %861
    %863 = vrot.lane.b32.xlu0 %v354, 113
    %v864 = vpop.permute.xlu0 %863
    %865 = vrot.lane.b32.xlu0 %v358, 113
    %v866 = vpop.permute.xlu0 %865
    %867 = vrot.lane.b32.xlu0 %v351, 113
    %v868 = vpop.permute.xlu0 %867
    %869 = vrot.lane.b32.xlu0 %v355, 113
    %v870 = vpop.permute.xlu0 %869
    %871 = vrot.lane.b32.xlu0 %v359, 113
    %v872 = vpop.permute.xlu0 %871
    %873 = vrot.lane.b32.xlu0 %v352, 113
    %v874 = vpop.permute.xlu0 %873
    %875 = vrot.lane.b32.xlu0 %v356, 113
    %v876 = vpop.permute.xlu0 %875
    %877 = vrot.lane.b32.xlu0 %v360, 113
    %v878 = vpop.permute.xlu0 %877
    %vm879 = vcmp.lt.s32.totalorder %v394, 113
    %v880 = vsel %vm879, %v868, %v874
    %v881 = vsel %vm879, %v870, %v876
    %v882 = vsel %vm879, %v872, %v878
    %v883 = vsel %vm879, %v862, %v868
    %v884 = vsel %vm879, %v864, %v870
    %v885 = vsel %vm879, %v866, %v872
    %v886 = vsel %vm879, %v856, %v862
    %v887 = vsel %vm879, %v858, %v864
    %v888 = vsel %vm879, %v860, %v866
    %v889 = vsel %vm879, %v874, %v856
    %v890 = vsel %vm879, %v876, %v858
    %v891 = vsel %vm879, %v878, %v860
    %892 = vset.pattern.permute.xlu0 6
    %893 = vperm.xlu0 %892, %v181
    %v894 = vpop.permute.xlu0 %893
    %896 = vset.pattern.permute.xlu0 6
    %897 = vperm.xlu0 %896, %v182
    %v898 = vpop.permute.xlu0 %897
    %900 = vset.pattern.permute.xlu0 6
    %901 = vperm.xlu0 %900, %v183
    %v902 = vpop.permute.xlu0 %901
    %v904 = vmul.f32 %v886, %v894
    %v905 = vmul.f32 %v883, %v894
    %v906 = vmul.f32 %v880, %v894
    %v907 = vmul.f32 %v889, %v894
    %v908 = vmul.f32 %v887, %v898
    %v909 = vmul.f32 %v884, %v898
    %v910 = vmul.f32 %v881, %v898
    %v911 = vmul.f32 %v890, %v898
    %v912 = vmul.f32 %v888, %v902
    %v913 = vmul.f32 %v885, %v902
    %v914 = vmul.f32 %v882, %v902
    %v915 = vmul.f32 %v891, %v902
    %v916 = vperm.slane %v361, 6
    %v917 = vperm.slane %v362, 6
    %v918 = vperm.slane %v363, 6
    %v919 = vperm.slane %v364, 6
    %v920 = vmul.f32 %v904, %v916
    %v921 = vmul.f32 %v905, %v917
    %v922 = vmul.f32 %v906, %v918
    %v923 = vmul.f32 %v907, %v919
    %v924 = vmul.f32 %v908, %v916
    %v925 = vmul.f32 %v909, %v917
    %v926 = vmul.f32 %v910, %v918
    %v927 = vmul.f32 %v911, %v919
    %v928 = vmul.f32 %v912, %v916
    %v929 = vmul.f32 %v913, %v917
    %v930 = vmul.f32 %v914, %v918
    %v931 = vmul.f32 %v915, %v919
    %v932 = vadd.f32 %v843, %v920
    %v933 = vadd.f32 %v844, %v921
    %v934 = vadd.f32 %v845, %v922
    %v935 = vadd.f32 %v846, %v923
    %v936 = vadd.f32 %v847, %v924
    %v937 = vadd.f32 %v848, %v925
    %v938 = vadd.f32 %v849, %v926
    %v939 = vadd.f32 %v850, %v927
    %v940 = vadd.f32 %v851, %v928
    %v941 = vadd.f32 %v852, %v929
    %v942 = vadd.f32 %v853, %v930
    %v943 = vadd.f32 %v854, %v931
    %944 = vrot.lane.b32.xlu0 %v349, 112
    %v945 = vpop.permute.xlu0 %944
    %946 = vrot.lane.b32.xlu0 %v353, 112
    %v947 = vpop.permute.xlu0 %946
    %948 = vrot.lane.b32.xlu0 %v357, 112
    %v949 = vpop.permute.xlu0 %948
    %950 = vrot.lane.b32.xlu0 %v350, 112
    %v951 = vpop.permute.xlu0 %950
    %952 = vrot.lane.b32.xlu0 %v354, 112
    %v953 = vpop.permute.xlu0 %952
    %954 = vrot.lane.b32.xlu0 %v358, 112
    %v955 = vpop.permute.xlu0 %954
    %956 = vrot.lane.b32.xlu0 %v351, 112
    %v957 = vpop.permute.xlu0 %956
    %958 = vrot.lane.b32.xlu0 %v355, 112
    %v959 = vpop.permute.xlu0 %958
    %960 = vrot.lane.b32.xlu0 %v359, 112
    %v961 = vpop.permute.xlu0 %960
    %962 = vrot.lane.b32.xlu0 %v352, 112
    %v963 = vpop.permute.xlu0 %962
    %964 = vrot.lane.b32.xlu0 %v356, 112
    %v965 = vpop.permute.xlu0 %964
    %966 = vrot.lane.b32.xlu0 %v360, 112
    %v967 = vpop.permute.xlu0 %966
    %vm968 = vcmp.lt.s32.totalorder %v394, 112
    %v969 = vsel %vm968, %v957, %v963
    %v970 = vsel %vm968, %v959, %v965
    %v971 = vsel %vm968, %v961, %v967
    %v972 = vsel %vm968, %v951, %v957
    %v973 = vsel %vm968, %v953, %v959
    %v974 = vsel %vm968, %v955, %v961
    %v975 = vsel %vm968, %v945, %v951
    %v976 = vsel %vm968, %v947, %v953
    %v977 = vsel %vm968, %v949, %v955
    %v978 = vsel %vm968, %v963, %v945
    %v979 = vsel %vm968, %v965, %v947
    %v980 = vsel %vm968, %v967, %v949
    %981 = vset.pattern.permute.xlu0 7
    %982 = vperm.xlu0 %981, %v181
    %v983 = vpop.permute.xlu0 %982
    %985 = vset.pattern.permute.xlu0 7
    %986 = vperm.xlu0 %985, %v182
    %v987 = vpop.permute.xlu0 %986
    %989 = vset.pattern.permute.xlu0 7
    %990 = vperm.xlu0 %989, %v183
    %v991 = vpop.permute.xlu0 %990
    %v993 = vmul.f32 %v975, %v983
    %v994 = vmul.f32 %v972, %v983
    %v995 = vmul.f32 %v969, %v983
    %v996 = vmul.f32 %v978, %v983
    %v997 = vmul.f32 %v976, %v987
    %v998 = vmul.f32 %v973, %v987
    %v999 = vmul.f32 %v970, %v987
    %v1000 = vmul.f32 %v979, %v987
    %v1001 = vmul.f32 %v977, %v991
    %v1002 = vmul.f32 %v974, %v991
    %v1003 = vmul.f32 %v971, %v991
    %v1004 = vmul.f32 %v980, %v991
    %v1005 = vperm.slane %v361, 7
    %v1006 = vperm.slane %v362, 7
    %v1007 = vperm.slane %v363, 7
    %v1008 = vperm.slane %v364, 7
    %v1009 = vmul.f32 %v993, %v1005
    %v1010 = vmul.f32 %v994, %v1006
    %v1011 = vmul.f32 %v995, %v1007
    %v1012 = vmul.f32 %v996, %v1008
    %v1013 = vmul.f32 %v997, %v1005
    %v1014 = vmul.f32 %v998, %v1006
    %v1015 = vmul.f32 %v999, %v1007
    %v1016 = vmul.f32 %v1000, %v1008
    %v1017 = vmul.f32 %v1001, %v1005
    %v1018 = vmul.f32 %v1002, %v1006
    %v1019 = vmul.f32 %v1003, %v1007
    %v1020 = vmul.f32 %v1004, %v1008
    %v1021 = vadd.f32 %v932, %v1009
    %v1022 = vadd.f32 %v933, %v1010
    %v1023 = vadd.f32 %v934, %v1011
    %v1024 = vadd.f32 %v935, %v1012
    %v1025 = vadd.f32 %v936, %v1013
    %v1026 = vadd.f32 %v937, %v1014
    %v1027 = vadd.f32 %v938, %v1015
    %v1028 = vadd.f32 %v939, %v1016
    %v1029 = vadd.f32 %v940, %v1017
    %v1030 = vadd.f32 %v941, %v1018
    %v1031 = vadd.f32 %v942, %v1019
    %v1032 = vadd.f32 %v943, %v1020
    %1033 = vrot.lane.b32.xlu0 %v349, 111
    %v1034 = vpop.permute.xlu0 %1033
    %1035 = vrot.lane.b32.xlu0 %v353, 111
    %v1036 = vpop.permute.xlu0 %1035
    %1037 = vrot.lane.b32.xlu0 %v357, 111
    %v1038 = vpop.permute.xlu0 %1037
    %1039 = vrot.lane.b32.xlu0 %v350, 111
    %v1040 = vpop.permute.xlu0 %1039
    %1041 = vrot.lane.b32.xlu0 %v354, 111
    %v1042 = vpop.permute.xlu0 %1041
    %1043 = vrot.lane.b32.xlu0 %v358, 111
    %v1044 = vpop.permute.xlu0 %1043
    %1045 = vrot.lane.b32.xlu0 %v351, 111
    %v1046 = vpop.permute.xlu0 %1045
    %1047 = vrot.lane.b32.xlu0 %v355, 111
    %v1048 = vpop.permute.xlu0 %1047
    %1049 = vrot.lane.b32.xlu0 %v359, 111
    %v1050 = vpop.permute.xlu0 %1049
    %1051 = vrot.lane.b32.xlu0 %v352, 111
    %v1052 = vpop.permute.xlu0 %1051
    %1053 = vrot.lane.b32.xlu0 %v356, 111
    %v1054 = vpop.permute.xlu0 %1053
    %1055 = vrot.lane.b32.xlu0 %v360, 111
    %v1056 = vpop.permute.xlu0 %1055
    %vm1057 = vcmp.lt.s32.totalorder %v394, 111
    %v1058 = vsel %vm1057, %v1046, %v1052
    %v1059 = vsel %vm1057, %v1048, %v1054
    %v1060 = vsel %vm1057, %v1050, %v1056
    %v1061 = vsel %vm1057, %v1040, %v1046
    %v1062 = vsel %vm1057, %v1042, %v1048
    %v1063 = vsel %vm1057, %v1044, %v1050
    %v1064 = vsel %vm1057, %v1034, %v1040
    %v1065 = vsel %vm1057, %v1036, %v1042
    %v1066 = vsel %vm1057, %v1038, %v1044
    %v1067 = vsel %vm1057, %v1052, %v1034
    %v1068 = vsel %vm1057, %v1054, %v1036
    %v1069 = vsel %vm1057, %v1056, %v1038
    %1070 = vset.pattern.permute.xlu0 8
    %1071 = vperm.xlu0 %1070, %v181
    %v1072 = vpop.permute.xlu0 %1071
    %1074 = vset.pattern.permute.xlu0 8
    %1075 = vperm.xlu0 %1074, %v182
    %v1076 = vpop.permute.xlu0 %1075
    %1078 = vset.pattern.permute.xlu0 8
    %1079 = vperm.xlu0 %1078, %v183
    %v1080 = vpop.permute.xlu0 %1079
    %v1082 = vmul.f32 %v1064, %v1072
    %v1083 = vmul.f32 %v1061, %v1072
    %v1084 = vmul.f32 %v1058, %v1072
    %v1085 = vmul.f32 %v1067, %v1072
    %v1086 = vmul.f32 %v1065, %v1076
    %v1087 = vmul.f32 %v1062, %v1076
    %v1088 = vmul.f32 %v1059, %v1076
    %v1089 = vmul.f32 %v1068, %v1076
    %v1090 = vmul.f32 %v1066, %v1080
    %v1091 = vmul.f32 %v1063, %v1080
    %v1092 = vmul.f32 %v1060, %v1080
    %v1093 = vmul.f32 %v1069, %v1080
    %v1094 = vperm.slane %v365, 0
    %v1095 = vperm.slane %v366, 0
    %v1096 = vperm.slane %v367, 0
    %v1097 = vperm.slane %v368, 0
    %v1098 = vmul.f32 %v1082, %v1094
    %v1099 = vmul.f32 %v1083, %v1095
    %v1100 = vmul.f32 %v1084, %v1096
    %v1101 = vmul.f32 %v1085, %v1097
    %v1102 = vmul.f32 %v1086, %v1094
    %v1103 = vmul.f32 %v1087, %v1095
    %v1104 = vmul.f32 %v1088, %v1096
    %v1105 = vmul.f32 %v1089, %v1097
    %v1106 = vmul.f32 %v1090, %v1094
    %v1107 = vmul.f32 %v1091, %v1095
    %v1108 = vmul.f32 %v1092, %v1096
    %v1109 = vmul.f32 %v1093, %v1097
    %v1110 = vadd.f32 %v1021, %v1098
    %v1111 = vadd.f32 %v1022, %v1099
    %v1112 = vadd.f32 %v1023, %v1100
    %v1113 = vadd.f32 %v1024, %v1101
    %v1114 = vadd.f32 %v1025, %v1102
    %v1115 = vadd.f32 %v1026, %v1103
    %v1116 = vadd.f32 %v1027, %v1104
    %v1117 = vadd.f32 %v1028, %v1105
    %v1118 = vadd.f32 %v1029, %v1106
    %v1119 = vadd.f32 %v1030, %v1107
    %v1120 = vadd.f32 %v1031, %v1108
    %v1121 = vadd.f32 %v1032, %v1109
    %1122 = vset.pattern.permute.xlu0 9
    %1123 = vperm.xlu0 %1122, %v181
    %v1124 = vpop.permute.xlu0 %1123
    %1126 = vset.pattern.permute.xlu0 9
    %1127 = vperm.xlu0 %1126, %v182
    %v1128 = vpop.permute.xlu0 %1127
    %1130 = vset.pattern.permute.xlu0 9
    %1131 = vperm.xlu0 %1130, %v183
    %v1132 = vpop.permute.xlu0 %1131
    %v1134 = vadd.f32 %v1110, %v1124
    %v1135 = vadd.f32 %v1111, %v1124
    %v1136 = vadd.f32 %v1112, %v1124
    %v1137 = vadd.f32 %v1113, %v1124
    %v1138 = vadd.f32 %v1114, %v1128
    %v1139 = vadd.f32 %v1115, %v1128
    %v1140 = vadd.f32 %v1116, %v1128
    %v1141 = vadd.f32 %v1117, %v1128
    %v1142 = vadd.f32 %v1118, %v1132
    %v1143 = vadd.f32 %v1119, %v1132
    %v1144 = vadd.f32 %v1120, %v1132
    %v1145 = vadd.f32 %v1121, %v1132
    %v1146 = vld [vmem:[%s2] sm:$0xf]
    %vm1147 = vcmask 195584
    %v1149 = vsel %vm1147, %v1146, 0
    %1151 = vmatpush.msra.mxu0 0.0
    %1152 = vmatpush.msra.mxu0 0.0
    %1153 = vmatpush.msra.mxu0 0.0
    %1154 = vmatpush.msra.mxu0 0.0
    %1155 = vmatpush.msra.mxu0 0.0
    %1156 = vmatpush.msra.mxu0 0.0
    %1157 = vmatpush.msra.mxu0 0.0
    %1158 = vmatpush.msra.mxu0 0.0
    %1159 = vmatpush.msra.mxu0 0.0
    %1160 = vmatpush.msra.mxu0 0.0
    %1161 = vmatpush.msra.mxu0 0.0
    %1162 = vmatpush.msra.mxu0 0.0
    %1163 = vmatpush.msra.mxu0 0.0
    %1164 = vmatpush.msra.mxu0 %v1142
    %1165 = vmatpush.msra.mxu0 %v1138
    %1166 = vmatpush.msra.mxu0 %v1134
    %1167 = vmatmul.f32.gmra.mxu0 %v1149
    %v1168 = vpop.f32.mrf.mxu0
    %v1169 = vadd.f32 0.0, %v1168
    %1170 = vdwg.mxu0
    %1171 = vmatpush.msra.mxu0 0.0
    %1172 = vmatpush.msra.mxu0 0.0
    %1173 = vmatpush.msra.mxu0 0.0
    %1174 = vmatpush.msra.mxu0 0.0
    %1175 = vmatpush.msra.mxu0 0.0
    %1176 = vmatpush.msra.mxu0 0.0
    %1177 = vmatpush.msra.mxu0 0.0
    %1178 = vmatpush.msra.mxu0 0.0
    %1179 = vmatpush.msra.mxu0 0.0
    %1180 = vmatpush.msra.mxu0 0.0
    %1181 = vmatpush.msra.mxu0 0.0
    %1182 = vmatpush.msra.mxu0 0.0
    %1183 = vmatpush.msra.mxu0 0.0
    %1184 = vmatpush.msra.mxu0 %v1143
    %1185 = vmatpush.msra.mxu0 %v1139
    %1186 = vmatpush.msra.mxu0 %v1135
    %1187 = vmatmul.f32.gmra.mxu0 %v1149
    %v1188 = vpop.f32.mrf.mxu0
    %v1189 = vadd.f32 0.0, %v1188
    %1190 = vdwg.mxu0
    %1191 = vmatpush.msra.mxu0 0.0
    %1192 = vmatpush.msra.mxu0 0.0
    %1193 = vmatpush.msra.mxu0 0.0
    %1194 = vmatpush.msra.mxu0 0.0
    %1195 = vmatpush.msra.mxu0 0.0
    %1196 = vmatpush.msra.mxu0 0.0
    %1197 = vmatpush.msra.mxu0 0.0
    %1198 = vmatpush.msra.mxu0 0.0
    %1199 = vmatpush.msra.mxu0 0.0
    %1200 = vmatpush.msra.mxu0 0.0
    %1201 = vmatpush.msra.mxu0 0.0
    %1202 = vmatpush.msra.mxu0 0.0
    %1203 = vmatpush.msra.mxu0 0.0
    %1204 = vmatpush.msra.mxu0 %v1144
    %1205 = vmatpush.msra.mxu0 %v1140
    %1206 = vmatpush.msra.mxu0 %v1136
    %1207 = vmatmul.f32.gmra.mxu0 %v1149
    %v1208 = vpop.f32.mrf.mxu0
    %v1209 = vadd.f32 0.0, %v1208
    %1210 = vdwg.mxu0
    %1211 = vmatpush.msra.mxu0 0.0
    %1212 = vmatpush.msra.mxu0 0.0
    %1213 = vmatpush.msra.mxu0 0.0
    %1214 = vmatpush.msra.mxu0 0.0
    %1215 = vmatpush.msra.mxu0 0.0
    %1216 = vmatpush.msra.mxu0 0.0
    %1217 = vmatpush.msra.mxu0 0.0
    %1218 = vmatpush.msra.mxu0 0.0
    %1219 = vmatpush.msra.mxu0 0.0
    %1220 = vmatpush.msra.mxu0 0.0
    %1221 = vmatpush.msra.mxu0 0.0
    %1222 = vmatpush.msra.mxu0 0.0
    %1223 = vmatpush.msra.mxu0 0.0
    %1224 = vmatpush.msra.mxu0 %v1145
    %1225 = vmatpush.msra.mxu0 %v1141
    %1226 = vmatpush.msra.mxu0 %v1137
    %1227 = vmatmul.f32.gmra.mxu0 %v1149
    %v1228 = vpop.f32.mrf.mxu0
    %v1229 = vadd.f32 0.0, %v1228
    %1230 = vdwg.mxu0
    %v1231 = vld [vmem:[%s4] sm:$0xf]
    %v1232 = vsel %vm68, %v1169, 0.0
    %v1233 = vsel %vm68, %v1189, 0.0
    %v1234 = vadd.f32 %v1232, %v1233
    %v1235 = vsel %vm68, %v1209, 0.0
    %v1236 = vadd.f32 %v1234, %v1235
    %v1237 = vsel %vm68, %v1229, 0.0
    %v1238 = vadd.f32 %v1236, %v1237
    %1239 = vadd.xlane.f32.xlu0 %v1238
    %v1240 = vpop.xlane.xlu0 %1239
    %v1241 = vmul.f32 %v1240, 0.001953125
    %v1242 = vmul.f32 %v1169, %v1169
    %v1243 = vmul.f32 %v1189, %v1189
    %v1244 = vmul.f32 %v1209, %v1209
    %v1245 = vmul.f32 %v1229, %v1229
    %v1246 = vsel %vm68, %v1242, 0.0
    %v1247 = vsel %vm68, %v1243, 0.0
    %v1248 = vadd.f32 %v1246, %v1247
    %v1249 = vsel %vm68, %v1244, 0.0
    %v1250 = vadd.f32 %v1248, %v1249
    %v1251 = vsel %vm68, %v1245, 0.0
    %v1252 = vadd.f32 %v1250, %v1251
    %1253 = vadd.xlane.f32.xlu0 %v1252
    %v1254 = vpop.xlane.xlu0 %1253
    %v1255 = vmul.f32 %v1254, 0.001953125
    %v1256 = vmul.f32 %v1241, %v1241
    %v1257 = vsub.f32 %v1255, %v1256
    %v1258 = vmax.f32 %v1257, 0.0
    %v1259 = vadd.f32 %v1258, 1e-05
    %v1260 = vrsqrt.pop %v1259
    %v1261 = vmul.f32 %v1260, %v1259
    %v1262 = vmul.f32 %v1261, %v1260
    %v1263 = vmul.f32 0.5, %v1262
    %v1264 = vsub.f32 1.5, %v1263
    %v1265 = vmul.f32 %v1260, %v1264
    %vm1266 = vweird.f32 %v1259
    %vm1267 = vweird.f32 %v1260
    %vm1268 = vmor %vm1266, %vm1267
    %v1269 = vsel %vm1268, %v1260, %v1265
    %v1270 = vmul.f32 %v1231, %v1269
    %v1271 = vmul.f32 %v1241, %v1270
    %1273 = vrot.lane.b32.xlu0 %v1271, 1
    %v1274 = vpop.permute.xlu0 %1273
    %v1276 = vsub.f32 %v1231, %v1274
    %1278 = vset.pattern.permute.xlu0 0
    %1279 = vperm.xlu0 %1278, %v1270
    %v1280 = vpop.permute.xlu0 %1279
    %v1282 = vmul.f32 %v1169, %v1280
    %v1283 = vmul.f32 %v1189, %v1280
    %v1284 = vmul.f32 %v1209, %v1280
    %v1285 = vmul.f32 %v1229, %v1280
    %1287 = vset.pattern.permute.xlu0 1
    %1288 = vperm.xlu0 %1287, %v1276
    %v1289 = vpop.permute.xlu0 %1288
    %v1291 = vadd.f32 %v1282, %v1289
    %v1292 = vadd.f32 %v1283, %v1289
    %v1293 = vadd.f32 %v1284, %v1289
    %v1294 = vadd.f32 %v1285, %v1289
    %v1295 = vadd.f32 %v1291, %v45
    %v1296 = vadd.f32 %v1292, %v46
    %v1297 = vadd.f32 %v1293, %v51
    %v1298 = vadd.f32 %v1294, %v52
    %v1301 = vrot.slane %v1296, 4
    %v1302 = vsel %vm68, %v1295, %v1301
    %1304 = vst [vmem:[#allocation5] sm:$0xff] %v1302
    %v1307 = vrot.slane %v1298, 4
    %v1308 = vsel %vm68, %v1297, %v1307
    %s1310 = scalar_lea.vmem [#allocation5], 8
    %1311 = vst [vmem:[%s1310] sm:$0xff] %v1308
    // Predicated region
    $region30: #{tpu_custom_call.1} parent=1 // pred_check
      _
    $region31: #{tpu_custom_call.1} parent=1 // pred_check_branch
      %1313 = sbr.rel (0) target = $region33
    $region32: #{tpu_custom_call.1} parent=1 // pred_region
      %1315 = vsyncadd [#allocation4], 0
      %s1316 = sshll.u32 [#allocation5], 4
      %s1317 = int_to_ptr.vmem [resolvable:$true] %s1316
      %s1318 = sshll.u32 %s6, 4
      %s1319 = int_to_ptr.hbm [resolvable:$true] %s1318
      %1324 = dma.vmem_to_hbm [thread:$0]  %s1317, 256, %s1319, [#allocation4], 128, 128, 8
    $region33: #{tpu_custom_call.1} parent=1 // pred_fallthru
      _
    // Predicated region
    $region34: #{tpu_custom_call.1} parent=1 // pred_check
      _
    $region35: #{tpu_custom_call.1} parent=1 // pred_check_branch
      %1326 = sbr.rel (0) target = $region37
    $region36: #{tpu_custom_call.1} parent=1 // pred_region
      %1328 = dma.done [#allocation4], 256
    $region37: #{tpu_custom_call.1} parent=1 // pred_fallthru
      _
    %1329 = vsyncpa [#allocation3], 1
    %1330 = vsyncpa [#allocation4], 1

</llo_original>
